<compile_context>
chip_gen: v7x
topology: tpu7x:2x2x1
jax: 0.10.0
libtpu: 0.0.40
codegen_flags: <defaults>
</compile_context>

<pallas_src>
import functools

import jax
import jax.numpy as jnp
from jax import lax
from jax.experimental import pallas as pl
from jax.experimental.pallas import tpu as pltpu

TEMP = 1.0        # args.temp in the reference code
PROJ_DIM = 256    # project_com output width
E1_DIM = 128      # embedding_net1 width (first slice of the fused matmul)
H_DIM = 64        # augment fc1 width (second slice of the fused matmul)
HEAD_PAD = 8      # fused p/mu/sigma head padded to 8 (full trailing dim)
NEG_BIG = -1e30   # additive key-padding mask value (f32 LSE-safe)


def _round_up(x, m):
    return (x + m - 1) // m * m


# ----------------------------- pass 1: MLP ----------------------------------
def mlp_kernel(x_ref, gd_ref,
               wp_ref, bp_ref,
               wf_ref, bf_bias_ref, wg_ref,
               wa3_ref, ba3_ref,
               we2_ref, be2_ref,
               wh_ref, bh_ref,
               out_ref, n1_ref, n2_ref, diag_ref):
    # project_com: Linear(input_dim, 256)  (bf16 MXU, f32 accumulate)
    bf = jnp.dot(x_ref[...], wp_ref[...],
                 preferred_element_type=jnp.float32) + bp_ref[...]
    bf16 = bf.astype(jnp.bfloat16)

    # fused [embedding_net1 | augment.fc1] matmul (N=192), one ReLU, then
    # lane-aligned slices: e1 = [:, :128], h = [:, 128:192].
    fused = jnp.maximum(
        jnp.dot(bf16, wf_ref[...], preferred_element_type=jnp.float32)
        + bf_bias_ref[...], 0.0)
    e1 = fused[:, :E1_DIM]
    h = fused[:, E1_DIM:]

    # hard Gumbel-softmax over 2 logits == sign of the logit difference.
    # w_gate = fc2_w[:,0]-fc2_w[:,1]; bias + gumbel differences folded into gd.
    gate_logit = jnp.sum(h * wg_ref[...], axis=-1, keepdims=True) + gd_ref[...]
    gate = (gate_logit >= 0.0).astype(jnp.float32)
    aug = jnp.maximum(
        jnp.dot((h * gate).astype(jnp.bfloat16), wa3_ref[...],
                preferred_element_type=jnp.float32) + ba3_ref[...], 0.0)

    # row-normalized embeddings for InfoNCE: f32 math, bf16 storage, f32 diag
    n1 = bf * lax.rsqrt(jnp.sum(bf * bf, axis=-1, keepdims=True) + 1e-8)
    n2 = aug * lax.rsqrt(jnp.sum(aug * aug, axis=-1, keepdims=True) + 1e-8)
    diag_ref[...] = jnp.sum(n1 * n2, axis=-1, keepdims=True)
    n1_ref[...] = n1.astype(jnp.bfloat16)
    n2_ref[...] = n2.astype(jnp.bfloat16)

    # embedding_net2 + fused p/mu/sigma head (8-lane padded output)
    e2 = jnp.maximum(
        jnp.dot(e1.astype(jnp.bfloat16), we2_ref[...],
                preferred_element_type=jnp.float32) + be2_ref[...], 0.0)
    out_ref[...] = jnp.dot(e2.astype(jnp.bfloat16), wh_ref[...],
                           preferred_element_type=jnp.float32) + bh_ref[...]


# --------------------- pass 2: streaming InfoNCE ----------------------------
def infonce_kernel(n1_ref, n2_ref, diag_ref, kmask_ref, perrow_ref,
                   m_sc, l_sc, *, inv_temp):
    ki = pl.program_id(1)

    @pl.when(ki == 0)
    def _():
        m_sc[...] = jnp.full_like(m_sc, -jnp.inf)
        l_sc[...] = jnp.zeros_like(l_sc)

    # (tq, tk) similarity tile, contracting last dims (no transpose)
    sim = lax.dot_general(n1_ref[...], n2_ref[...],
                          (((1,), (1,)), ((), ())),
                          preferred_element_type=jnp.float32) * inv_temp
    sim = sim + kmask_ref[...]          # additive key-padding mask (0 / -1e30)

    # online (flash-style) log-sum-exp over key tiles
    m_prev = m_sc[...]
    m_new = jnp.maximum(m_prev, jnp.max(sim, axis=-1, keepdims=True))
    l_sc[...] = (l_sc[...] * jnp.exp(m_prev - m_new)
                 + jnp.sum(jnp.exp(sim - m_new), axis=-1, keepdims=True))
    m_sc[...] = m_new

    @pl.when(ki == pl.num_programs(1) - 1)
    def _():
        lse = m_sc[...] + jnp.log(l_sc[...])
        perrow_ref[...] = lse - diag_ref[...] * inv_temp


# ------------------------------ parameters ----------------------------------
def init_linear(key, fan_in, fan_out):
    """PyTorch-style uniform(+-1/sqrt(fan_in)) init; W stored as (in, out)."""
    k1, k2 = jax.random.split(key)
    bound = 1.0 / (fan_in ** 0.5)
    w = jax.random.uniform(k1, (fan_in, fan_out), jnp.float32, -bound, bound)
    b = jax.random.uniform(k2, (1, fan_out), jnp.float32, -bound, bound)
    return w, b


def init_raw_params(key, input_dim):
    ks = jax.random.split(key, 9)
    wp, bp = init_linear(ks[0], input_dim, PROJ_DIM)  # project_com
    wa1, ba1 = init_linear(ks[1], PROJ_DIM, H_DIM)    # augment fc1
    wa2, ba2 = init_linear(ks[2], H_DIM, 2)           # augment fc2 (gate logits)
    wa3, ba3 = init_linear(ks[3], H_DIM, PROJ_DIM)    # augment fc3
    we1, be1 = init_linear(ks[4], PROJ_DIM, E1_DIM)   # embedding_net1
    we2, be2 = init_linear(ks[5], E1_DIM, 64)         # embedding_net2
    wpl, bpl = init_linear(ks[6], 64, 1)              # p_layer
    wmu, bmu = init_linear(ks[7], 64, 1)              # mu_layer
    wsg, bsg = init_linear(ks[8], 64, 1)              # sigma_layer
    return dict(wp=wp, bp=bp, wa1=wa1, ba1=ba1, wa2=wa2, ba2=ba2,
                wa3=wa3, ba3=ba3, we1=we1, be1=be1, we2=we2, be2=be2,
                wpl=wpl, bpl=bpl, wmu=wmu, bmu=bmu, wsg=wsg, bsg=bsg)


def pack_params(raw):
    """Kernel-facing params: bf16 matmul weights, fused e1|h weight, single
    gate column, fused + 8-lane-padded prediction head."""
    b16 = jnp.bfloat16
    # fused [embedding_net1 | augment.fc1]: e1 occupies lanes 0..127, h 128..191
    w_fused = jnp.concatenate([raw["we1"], raw["wa1"]], axis=1)       # (256,192)
    b_fused = jnp.concatenate([raw["be1"], raw["ba1"]], axis=1)       # (1,192)
    w_gate = (raw["wa2"][:, 0:1] - raw["wa2"][:, 1:2]).T              # (1,64)
    b_gate = raw["ba2"][0, 0] - raw["ba2"][0, 1]                      # scalar
    wh = jnp.concatenate([raw["wpl"], raw["wmu"], raw["wsg"]], axis=1)  # (64,3)
    bh = jnp.concatenate([raw["bpl"], raw["bmu"], raw["bsg"]], axis=1)  # (1,3)
    wh = jnp.pad(wh, ((0, 0), (0, HEAD_PAD - wh.shape[1])))
    bh = jnp.pad(bh, ((0, 0), (0, HEAD_PAD - bh.shape[1])))
    return dict(
        wp=raw["wp"].astype(b16), bp=raw["bp"],
        w_fused=w_fused.astype(b16), b_fused=b_fused,
        w_gate=w_gate, b_gate=b_gate,
        wa3=raw["wa3"].astype(b16), ba3=raw["ba3"],
        we2=raw["we2"].astype(b16), be2=raw["be2"],
        wh=wh.astype(b16), bh=bh,
    )


# ------------------------------- forward -------------------------------------
def ssl_ltv_forward(x, gumbel, params, *, tile=256, temp=TEMP):
    B, D = x.shape
    batch_pad = _round_up(B, tile)
    num_tiles = batch_pad // tile

    # 2-class gumbel-softmax only needs the (logit + gumbel) difference; fold
    # the fc2 bias difference in, so the kernel sees a single (B, 1) column.
    gd = (gumbel[:, 0:1] - gumbel[:, 1:2]) + params["b_gate"]
    xp = jnp.pad(x, ((0, batch_pad - B), (0, 0))).astype(jnp.bfloat16)
    gdp = jnp.pad(gd, ((0, batch_pad - B), (0, 0)))

    weight_names = ("wp", "bp", "w_fused", "b_fused", "w_gate",
                    "wa3", "ba3", "we2", "be2", "wh", "bh")
    weights = [params[k] for k in weight_names]

    def _resident(arr):      # whole weight stays VMEM-resident across tiles
        nd = arr.ndim
        return pl.BlockSpec(arr.shape, lambda i, _nd=nd: (0,) * _nd)

    # ---- pass 1: per-tile MLP, parallel over the batch tiles -------------
    out_pad, n1, n2, diag = pl.pallas_call(
        mlp_kernel,
        grid=(num_tiles,),
        in_specs=[pl.BlockSpec((tile, D), lambda i: (i, 0)),
                  pl.BlockSpec((tile, 1), lambda i: (i, 0))]
                 + [_resident(w) for w in weights],
        out_specs=(pl.BlockSpec((tile, HEAD_PAD), lambda i: (i, 0)),
                   pl.BlockSpec((tile, PROJ_DIM), lambda i: (i, 0)),
                   pl.BlockSpec((tile, PROJ_DIM), lambda i: (i, 0)),
                   pl.BlockSpec((tile, 1), lambda i: (i, 0))),
        out_shape=(jax.ShapeDtypeStruct((batch_pad, HEAD_PAD), jnp.float32),
                   jax.ShapeDtypeStruct((batch_pad, PROJ_DIM), jnp.bfloat16),
                   jax.ShapeDtypeStruct((batch_pad, PROJ_DIM), jnp.bfloat16),
                   jax.ShapeDtypeStruct((batch_pad, 1), jnp.float32)),
        compiler_params=pltpu.CompilerParams(
            dimension_semantics=("parallel",)),
    )(xp, gdp, *weights)

    # ---- pass 2: full-batch InfoNCE, flash-style LSE over key tiles -------
    # additive key-padding mask computed once in the wrapper (no in-loop iota)
    kmask = jnp.where(jnp.arange(batch_pad) < B, 0.0, NEG_BIG)
    kmask = kmask.reshape(1, batch_pad).astype(jnp.float32)

    perrow = pl.pallas_call(
        functools.partial(infonce_kernel, inv_temp=1.0 / temp),
        grid=(num_tiles, num_tiles),
        in_specs=[pl.BlockSpec((tile, PROJ_DIM), lambda qi, ki: (qi, 0)),
                  pl.BlockSpec((tile, PROJ_DIM), lambda qi, ki: (ki, 0)),
                  pl.BlockSpec((tile, 1), lambda qi, ki: (qi, 0)),
                  pl.BlockSpec((1, tile), lambda qi, ki: (0, ki))],
        out_specs=pl.BlockSpec((tile, 1), lambda qi, ki: (qi, 0)),
        out_shape=jax.ShapeDtypeStruct((batch_pad, 1), jnp.float32),
        scratch_shapes=[pltpu.VMEM((tile, 1), jnp.float32),
                        pltpu.VMEM((tile, 1), jnp.float32)],
        compiler_params=pltpu.CompilerParams(
            dimension_semantics=("parallel", "arbitrary")),
    )(n1, n2, diag, kmask)

    loss = jnp.sum(perrow[:B, 0]) / B
    return out_pad[:B, :3], loss


# -------------------------- pure-JAX reference -------------------------------
def ssl_ltv_reference(x, gumbel, raw, temp=TEMP):
    bf = x @ raw["wp"] + raw["bp"]
    h = jnp.maximum(bf @ raw["wa1"] + raw["ba1"], 0.0)
    y = h @ raw["wa2"] + raw["ba2"] + gumbel
    gate = (y[:, 0:1] >= y[:, 1:2]).astype(jnp.float32)
    aug = jnp.maximum((h * gate) @ raw["wa3"] + raw["ba3"], 0.0)
    n1 = bf / jnp.sqrt(1e-8 + jnp.sum(bf * bf, -1, keepdims=True))
    n2 = aug / jnp.sqrt(1e-8 + jnp.sum(aug * aug, -1, keepdims=True))
    sim = (n1 @ n2.T) / temp
    m = jnp.max(sim, axis=-1, keepdims=True)
    lse = (m + jnp.log(jnp.sum(jnp.exp(sim - m), axis=-1, keepdims=True)))[:, 0]
    loss = jnp.mean(lse - jnp.diagonal(sim))
    e1 = jnp.maximum(bf @ raw["we1"] + raw["be1"], 0.0)
    e2 = jnp.maximum(e1 @ raw["we2"] + raw["be2"], 0.0)
    out = jnp.concatenate([e2 @ raw["wpl"] + raw["bpl"],
                           e2 @ raw["wmu"] + raw["bmu"],
                           e2 @ raw["wsg"] + raw["bsg"]], axis=-1)
    return out, loss


if __name__ == "__main__":
    B, INPUT_DIM = 200, 32
    root = jax.random.PRNGKey(0)
    k_x, k_g, k_p = jax.random.split(root, 3)

    x = jax.random.normal(k_x, (B, INPUT_DIM), jnp.float32)
    # Gumbel noise for F.gumbel_softmax, sampled in glue (kernel deterministic)
    u = jax.random.uniform(k_g, (B, 2), jnp.float32, 1e-10, 1.0)
    gumbel = -jnp.log(-jnp.log(u))

    raw = init_raw_params(k_p, INPUT_DIM)
    params = pack_params(raw)
    ref_out, ref_loss = ssl_ltv_reference(x, gumbel, raw)

    # exercise both the multi-tile path (tile=128 -> 2x2 InfoNCE grid) and the
    # production default (tile=256, full MXU M-occupancy on v6e/v7x)
    for t in (128, 256):
        out, cl_loss = ssl_ltv_forward(x, gumbel, params, tile=t)
        jax.block_until_ready((out, cl_loss))
        assert out.shape == (B, 3) and cl_loss.shape == ()
        assert bool(jnp.all(jnp.isfinite(out))) and bool(jnp.isfinite(cl_loss))
        # loose numerical check vs pure-JAX f32 reference (kernel matmuls are bf16)
        assert bool(jnp.allclose(out, ref_out, atol=0.1, rtol=0.1)), \
            f"head mismatch (tile={t})"
        assert abs(float(cl_loss) - float(ref_loss)) < 0.3, \
            f"InfoNCE loss mismatch (tile={t})"

    print("KERNEL_OK")
</pallas_src>

<mosaic_0001>
module attributes {stable_mosaic.version = 11 : i64} {
  func.func @mlp_kernel(%arg0: i32, %arg1: memref<128x32xbf16, #tpu.memory_space<vmem>>, %arg2: memref<128x1xf32, #tpu.memory_space<vmem>>, %arg3: memref<32x256xbf16, #tpu.memory_space<vmem>>, %arg4: memref<1x256xf32, #tpu.memory_space<vmem>>, %arg5: memref<256x192xbf16, #tpu.memory_space<vmem>>, %arg6: memref<1x192xf32, #tpu.memory_space<vmem>>, %arg7: memref<1x64xf32, #tpu.memory_space<vmem>>, %arg8: memref<64x256xbf16, #tpu.memory_space<vmem>>, %arg9: memref<1x256xf32, #tpu.memory_space<vmem>>, %arg10: memref<128x64xbf16, #tpu.memory_space<vmem>>, %arg11: memref<1x64xf32, #tpu.memory_space<vmem>>, %arg12: memref<64x8xbf16, #tpu.memory_space<vmem>>, %arg13: memref<1x8xf32, #tpu.memory_space<vmem>>, %arg14: memref<128x8xf32, #tpu.memory_space<vmem>>, %arg15: memref<128x256xbf16, #tpu.memory_space<vmem>>, %arg16: memref<128x256xbf16, #tpu.memory_space<vmem>>, %arg17: memref<128x1xf32, #tpu.memory_space<vmem>>) attributes {dimension_semantics = [#tpu.dimension_semantics<parallel>], iteration_bounds = array<i64: 2>, scalar_prefetch = 0 : i64, scratch_operands = 0 : i64, tpu.core_type = #tpu.core_type<tc>, window_params = [{transform_indices = @transform_0, window_bounds = array<i64: 128, 32>}, {transform_indices = @transform_1, window_bounds = array<i64: 128, 1>}, {pipeline_mode = #tpu.pipeline_mode<synchronous>, transform_indices = @transform_2, window_bounds = array<i64: 32, 256>}, {pipeline_mode = #tpu.pipeline_mode<synchronous>, transform_indices = @transform_3, window_bounds = array<i64: 1, 256>}, {pipeline_mode = #tpu.pipeline_mode<synchronous>, transform_indices = @transform_4, window_bounds = array<i64: 256, 192>}, {pipeline_mode = #tpu.pipeline_mode<synchronous>, transform_indices = @transform_5, window_bounds = array<i64: 1, 192>}, {pipeline_mode = #tpu.pipeline_mode<synchronous>, transform_indices = @transform_6, window_bounds = array<i64: 1, 64>}, {pipeline_mode = #tpu.pipeline_mode<synchronous>, transform_indices = @transform_7, window_bounds = array<i64: 64, 256>}, {pipeline_mode = #tpu.pipeline_mode<synchronous>, transform_indices = @transform_8, window_bounds = array<i64: 1, 256>}, {pipeline_mode = #tpu.pipeline_mode<synchronous>, transform_indices = @transform_9, window_bounds = array<i64: 128, 64>}, {pipeline_mode = #tpu.pipeline_mode<synchronous>, transform_indices = @transform_10, window_bounds = array<i64: 1, 64>}, {pipeline_mode = #tpu.pipeline_mode<synchronous>, transform_indices = @transform_11, window_bounds = array<i64: 64, 8>}, {pipeline_mode = #tpu.pipeline_mode<synchronous>, transform_indices = @transform_12, window_bounds = array<i64: 1, 8>}, {transform_indices = @transform_13, window_bounds = array<i64: 128, 8>}, {transform_indices = @transform_14, window_bounds = array<i64: 128, 256>}, {transform_indices = @transform_15, window_bounds = array<i64: 128, 256>}, {transform_indices = @transform_16, window_bounds = array<i64: 128, 1>}]} {
    %c0 = arith.constant 0 : index
    %c0_0 = arith.constant 0 : index
    %0 = vector.load %arg1[%c0, %c0_0] : memref<128x32xbf16, #tpu.memory_space<vmem>>, vector<128x32xbf16>
    %c0_1 = arith.constant 0 : index
    %c0_2 = arith.constant 0 : index
    %1 = vector.load %arg3[%c0_1, %c0_2] : memref<32x256xbf16, #tpu.memory_space<vmem>>, vector<32x256xbf16>
    %cst = arith.constant dense<0.000000e+00> : vector<128x256xf32>
    %2 = tpu.matmul %0, %1, %cst {dimension_numbers = #tpu.dot_dimension_numbers<[1], [0], [0], [1], [0, 0, 1, 1], [], []>} : vector<128x32xbf16>, vector<32x256xbf16>, vector<128x256xf32> -> vector<128x256xf32>
    %c0_3 = arith.constant 0 : index
    %c0_4 = arith.constant 0 : index
    %3 = vector.load %arg4[%c0_3, %c0_4] : memref<1x256xf32, #tpu.memory_space<vmem>>, vector<1x256xf32>
    %4 = vector.broadcast %3 : vector<1x256xf32> to vector<128x256xf32>
    %5 = arith.addf %2, %4 : vector<128x256xf32>
    %6 = arith.truncf %5 : vector<128x256xf32> to vector<128x256xbf16>
    %c0_5 = arith.constant 0 : index
    %c0_6 = arith.constant 0 : index
    %7 = vector.load %arg5[%c0_5, %c0_6] : memref<256x192xbf16, #tpu.memory_space<vmem>>, vector<256x192xbf16>
    %cst_7 = arith.constant dense<0.000000e+00> : vector<128x192xf32>
    %8 = tpu.matmul %6, %7, %cst_7 {dimension_numbers = #tpu.dot_dimension_numbers<[1], [0], [0], [1], [0, 0, 1, 1], [], []>} : vector<128x256xbf16>, vector<256x192xbf16>, vector<128x192xf32> -> vector<128x192xf32>
    %c0_8 = arith.constant 0 : index
    %c0_9 = arith.constant 0 : index
    %9 = vector.load %arg6[%c0_8, %c0_9] : memref<1x192xf32, #tpu.memory_space<vmem>>, vector<1x192xf32>
    %10 = vector.broadcast %9 : vector<1x192xf32> to vector<128x192xf32>
    %11 = arith.addf %8, %10 : vector<128x192xf32>
    %cst_10 = arith.constant 0.000000e+00 : f32
    %12 = vector.broadcast %cst_10 : f32 to vector<128x192xf32>
    %13 = arith.maximumf %11, %12 : vector<128x192xf32>
    %14 = vector.extract_strided_slice %13 {offsets = [0, 0], sizes = [128, 128], strides = [1, 1]} : vector<128x192xf32> to vector<128x128xf32>
    %15 = vector.extract_strided_slice %13 {offsets = [0, 128], sizes = [128, 64], strides = [1, 1]} : vector<128x192xf32> to vector<128x64xf32>
    %c0_11 = arith.constant 0 : index
    %c0_12 = arith.constant 0 : index
    %16 = vector.load %arg7[%c0_11, %c0_12] : memref<1x64xf32, #tpu.memory_space<vmem>>, vector<1x64xf32>
    %17 = vector.broadcast %16 : vector<1x64xf32> to vector<128x64xf32>
    %18 = arith.mulf %15, %17 : vector<128x64xf32>
    %cst_13 = arith.constant dense<0.000000e+00> : vector<128xf32>
    %19 = vector.multi_reduction <add>, %18, %cst_13 [1] : vector<128x64xf32> to vector<128xf32>
    %20 = vector.shape_cast %19 : vector<128xf32> to vector<128x1xf32>
    %c0_14 = arith.constant 0 : index
    %c0_15 = arith.constant 0 : index
    %21 = vector.load %arg2[%c0_14, %c0_15] : memref<128x1xf32, #tpu.memory_space<vmem>>, vector<128x1xf32>
    %22 = arith.addf %20, %21 : vector<128x1xf32>
    %cst_16 = arith.constant 0.000000e+00 : f32
    %23 = vector.broadcast %cst_16 : f32 to vector<128x1xf32>
    %24 = arith.cmpf oge, %22, %23 : vector<128x1xf32>
    %25 = arith.extui %24 : vector<128x1xi1> to vector<128x1xi32>
    %26 = arith.sitofp %25 : vector<128x1xi32> to vector<128x1xf32>
    %27 = vector.broadcast %26 : vector<128x1xf32> to vector<128x64xf32>
    %28 = arith.mulf %15, %27 : vector<128x64xf32>
    %29 = arith.truncf %28 : vector<128x64xf32> to vector<128x64xbf16>
    %c0_17 = arith.constant 0 : index
    %c0_18 = arith.constant 0 : index
    %30 = vector.load %arg8[%c0_17, %c0_18] : memref<64x256xbf16, #tpu.memory_space<vmem>>, vector<64x256xbf16>
    %cst_19 = arith.constant dense<0.000000e+00> : vector<128x256xf32>
    %31 = tpu.matmul %29, %30, %cst_19 {dimension_numbers = #tpu.dot_dimension_numbers<[1], [0], [0], [1], [0, 0, 1, 1], [], []>} : vector<128x64xbf16>, vector<64x256xbf16>, vector<128x256xf32> -> vector<128x256xf32>
    %c0_20 = arith.constant 0 : index
    %c0_21 = arith.constant 0 : index
    %32 = vector.load %arg9[%c0_20, %c0_21] : memref<1x256xf32, #tpu.memory_space<vmem>>, vector<1x256xf32>
    %33 = vector.broadcast %32 : vector<1x256xf32> to vector<128x256xf32>
    %34 = arith.addf %31, %33 : vector<128x256xf32>
    %cst_22 = arith.constant 0.000000e+00 : f32
    %35 = vector.broadcast %cst_22 : f32 to vector<128x256xf32>
    %36 = arith.maximumf %34, %35 : vector<128x256xf32>
    %37 = arith.mulf %5, %5 : vector<128x256xf32>
    %cst_23 = arith.constant dense<0.000000e+00> : vector<128xf32>
    %38 = vector.multi_reduction <add>, %37, %cst_23 [1] : vector<128x256xf32> to vector<128xf32>
    %39 = vector.shape_cast %38 : vector<128xf32> to vector<128x1xf32>
    %cst_24 = arith.constant 9.99999993E-9 : f32
    %40 = vector.broadcast %cst_24 : f32 to vector<128x1xf32>
    %41 = arith.addf %39, %40 : vector<128x1xf32>
    %42 = math.rsqrt %41 : vector<128x1xf32>
    %43 = vector.broadcast %42 : vector<128x1xf32> to vector<128x256xf32>
    %44 = arith.mulf %5, %43 : vector<128x256xf32>
    %45 = arith.mulf %36, %36 : vector<128x256xf32>
    %cst_25 = arith.constant dense<0.000000e+00> : vector<128xf32>
    %46 = vector.multi_reduction <add>, %45, %cst_25 [1] : vector<128x256xf32> to vector<128xf32>
    %47 = vector.shape_cast %46 : vector<128xf32> to vector<128x1xf32>
    %cst_26 = arith.constant 9.99999993E-9 : f32
    %48 = vector.broadcast %cst_26 : f32 to vector<128x1xf32>
    %49 = arith.addf %47, %48 : vector<128x1xf32>
    %50 = math.rsqrt %49 : vector<128x1xf32>
    %51 = vector.broadcast %50 : vector<128x1xf32> to vector<128x256xf32>
    %52 = arith.mulf %36, %51 : vector<128x256xf32>
    %53 = arith.mulf %44, %52 : vector<128x256xf32>
    %cst_27 = arith.constant dense<0.000000e+00> : vector<128xf32>
    %54 = vector.multi_reduction <add>, %53, %cst_27 [1] : vector<128x256xf32> to vector<128xf32>
    %55 = vector.shape_cast %54 : vector<128xf32> to vector<128x1xf32>
    %c0_28 = arith.constant 0 : index
    %c0_29 = arith.constant 0 : index
    %56 = vector.load %arg17[%c0_28, %c0_29] : memref<128x1xf32, #tpu.memory_space<vmem>>, vector<128x1xf32>
    tpu.vector_store %arg17[%c0_28, %c0_29], %55 {strides = array<i32>} : memref<128x1xf32, #tpu.memory_space<vmem>>, vector<128x1xf32>,
    %57 = arith.truncf %44 : vector<128x256xf32> to vector<128x256xbf16>
    %c0_30 = arith.constant 0 : index
    %c0_31 = arith.constant 0 : index
    %58 = vector.load %arg15[%c0_30, %c0_31] : memref<128x256xbf16, #tpu.memory_space<vmem>>, vector<128x256xbf16>
    tpu.vector_store %arg15[%c0_30, %c0_31], %57 {strides = array<i32>} : memref<128x256xbf16, #tpu.memory_space<vmem>>, vector<128x256xbf16>,
    %59 = arith.truncf %52 : vector<128x256xf32> to vector<128x256xbf16>
    %c0_32 = arith.constant 0 : index
    %c0_33 = arith.constant 0 : index
    %60 = vector.load %arg16[%c0_32, %c0_33] : memref<128x256xbf16, #tpu.memory_space<vmem>>, vector<128x256xbf16>
    tpu.vector_store %arg16[%c0_32, %c0_33], %59 {strides = array<i32>} : memref<128x256xbf16, #tpu.memory_space<vmem>>, vector<128x256xbf16>,
    %61 = arith.truncf %14 : vector<128x128xf32> to vector<128x128xbf16>
    %c0_34 = arith.constant 0 : index
    %c0_35 = arith.constant 0 : index
    %62 = vector.load %arg10[%c0_34, %c0_35] : memref<128x64xbf16, #tpu.memory_space<vmem>>, vector<128x64xbf16>
    %cst_36 = arith.constant dense<0.000000e+00> : vector<128x64xf32>
    %63 = tpu.matmul %61, %62, %cst_36 {dimension_numbers = #tpu.dot_dimension_numbers<[1], [0], [0], [1], [0, 0, 1, 1], [], []>} : vector<128x128xbf16>, vector<128x64xbf16>, vector<128x64xf32> -> vector<128x64xf32>
    %c0_37 = arith.constant 0 : index
    %c0_38 = arith.constant 0 : index
    %64 = vector.load %arg11[%c0_37, %c0_38] : memref<1x64xf32, #tpu.memory_space<vmem>>, vector<1x64xf32>
    %65 = vector.broadcast %64 : vector<1x64xf32> to vector<128x64xf32>
    %66 = arith.addf %63, %65 : vector<128x64xf32>
    %cst_39 = arith.constant 0.000000e+00 : f32
    %67 = vector.broadcast %cst_39 : f32 to vector<128x64xf32>
    %68 = arith.maximumf %66, %67 : vector<128x64xf32>
    %69 = arith.truncf %68 : vector<128x64xf32> to vector<128x64xbf16>
    %c0_40 = arith.constant 0 : index
    %c0_41 = arith.constant 0 : index
    %70 = vector.load %arg12[%c0_40, %c0_41] : memref<64x8xbf16, #tpu.memory_space<vmem>>, vector<64x8xbf16>
    %cst_42 = arith.constant dense<0.000000e+00> : vector<128x8xf32>
    %71 = tpu.matmul %69, %70, %cst_42 {dimension_numbers = #tpu.dot_dimension_numbers<[1], [0], [0], [1], [0, 0, 1, 1], [], []>} : vector<128x64xbf16>, vector<64x8xbf16>, vector<128x8xf32> -> vector<128x8xf32>
    %c0_43 = arith.constant 0 : index
    %c0_44 = arith.constant 0 : index
    %72 = vector.load %arg13[%c0_43, %c0_44] : memref<1x8xf32, #tpu.memory_space<vmem>>, vector<1x8xf32>
    %73 = vector.broadcast %72 : vector<1x8xf32> to vector<128x8xf32>
    %74 = arith.addf %71, %73 : vector<128x8xf32>
    %c0_45 = arith.constant 0 : index
    %c0_46 = arith.constant 0 : index
    %75 = vector.load %arg14[%c0_45, %c0_46] : memref<128x8xf32, #tpu.memory_space<vmem>>, vector<128x8xf32>
    tpu.vector_store %arg14[%c0_45, %c0_46], %74 {strides = array<i32>} : memref<128x8xf32, #tpu.memory_space<vmem>>, vector<128x8xf32>,
    return
  }
  func.func @transform_0(%arg0: i32) -> (i32, i32) {
    %c0_i32 = arith.constant 0 : i32
    %c0_i32_0 = arith.constant 0 : i32
    return %arg0, %c0_i32 : i32, i32
  }
  func.func @transform_1(%arg0: i32) -> (i32, i32) {
    %c0_i32 = arith.constant 0 : i32
    %c0_i32_0 = arith.constant 0 : i32
    return %arg0, %c0_i32 : i32, i32
  }
  func.func @transform_2(%arg0: i32) -> (i32, i32) {
    %c0_i32 = arith.constant 0 : i32
    %c0_i32_0 = arith.constant 0 : i32
    %c0_i32_1 = arith.constant 0 : i32
    return %c0_i32, %c0_i32_0 : i32, i32
  }
  func.func @transform_3(%arg0: i32) -> (i32, i32) {
    %c0_i32 = arith.constant 0 : i32
    %c0_i32_0 = arith.constant 0 : i32
    %c0_i32_1 = arith.constant 0 : i32
    return %c0_i32, %c0_i32_0 : i32, i32
  }
  func.func @transform_4(%arg0: i32) -> (i32, i32) {
    %c0_i32 = arith.constant 0 : i32
    %c0_i32_0 = arith.constant 0 : i32
    %c0_i32_1 = arith.constant 0 : i32
    return %c0_i32, %c0_i32_0 : i32, i32
  }
  func.func @transform_5(%arg0: i32) -> (i32, i32) {
    %c0_i32 = arith.constant 0 : i32
    %c0_i32_0 = arith.constant 0 : i32
    %c0_i32_1 = arith.constant 0 : i32
    return %c0_i32, %c0_i32_0 : i32, i32
  }
  func.func @transform_6(%arg0: i32) -> (i32, i32) {
    %c0_i32 = arith.constant 0 : i32
    %c0_i32_0 = arith.constant 0 : i32
    %c0_i32_1 = arith.constant 0 : i32
    return %c0_i32, %c0_i32_0 : i32, i32
  }
  func.func @transform_7(%arg0: i32) -> (i32, i32) {
    %c0_i32 = arith.constant 0 : i32
    %c0_i32_0 = arith.constant 0 : i32
    %c0_i32_1 = arith.constant 0 : i32
    return %c0_i32, %c0_i32_0 : i32, i32
  }
  func.func @transform_8(%arg0: i32) -> (i32, i32) {
    %c0_i32 = arith.constant 0 : i32
    %c0_i32_0 = arith.constant 0 : i32
    %c0_i32_1 = arith.constant 0 : i32
    return %c0_i32, %c0_i32_0 : i32, i32
  }
  func.func @transform_9(%arg0: i32) -> (i32, i32) {
    %c0_i32 = arith.constant 0 : i32
    %c0_i32_0 = arith.constant 0 : i32
    %c0_i32_1 = arith.constant 0 : i32
    return %c0_i32, %c0_i32_0 : i32, i32
  }
  func.func @transform_10(%arg0: i32) -> (i32, i32) {
    %c0_i32 = arith.constant 0 : i32
    %c0_i32_0 = arith.constant 0 : i32
    %c0_i32_1 = arith.constant 0 : i32
    return %c0_i32, %c0_i32_0 : i32, i32
  }
  func.func @transform_11(%arg0: i32) -> (i32, i32) {
    %c0_i32 = arith.constant 0 : i32
    %c0_i32_0 = arith.constant 0 : i32
    %c0_i32_1 = arith.constant 0 : i32
    return %c0_i32, %c0_i32_0 : i32, i32
  }
  func.func @transform_12(%arg0: i32) -> (i32, i32) {
    %c0_i32 = arith.constant 0 : i32
    %c0_i32_0 = arith.constant 0 : i32
    %c0_i32_1 = arith.constant 0 : i32
    return %c0_i32, %c0_i32_0 : i32, i32
  }
  func.func @transform_13(%arg0: i32) -> (i32, i32) {
    %c0_i32 = arith.constant 0 : i32
    %c0_i32_0 = arith.constant 0 : i32
    return %arg0, %c0_i32 : i32, i32
  }
  func.func @transform_14(%arg0: i32) -> (i32, i32) {
    %c0_i32 = arith.constant 0 : i32
    %c0_i32_0 = arith.constant 0 : i32
    return %arg0, %c0_i32 : i32, i32
  }
  func.func @transform_15(%arg0: i32) -> (i32, i32) {
    %c0_i32 = arith.constant 0 : i32
    %c0_i32_0 = arith.constant 0 : i32
    return %arg0, %c0_i32 : i32, i32
  }
  func.func @transform_16(%arg0: i32) -> (i32, i32) {
    %c0_i32 = arith.constant 0 : i32
    %c0_i32_0 = arith.constant 0 : i32
    return %arg0, %c0_i32 : i32, i32
  }
}

</mosaic_0001>

<llo_original>
// kernel: tpu_custom_call.1
$region0: #{tpu_custom_call.1}
  #allocation0 [shape = 'u32[]', space=smem, size = 0x4, offset = 0x4, fixed_abs, tag = 'smem constant byte address 0x4 - core index']
  #allocation1 [shape = 'u32[144,128]{1,0:T(1,128)}', space=vmem, size = 0x12000, scoped, tag = 'internal scratch']
  %s0 = inlined_call_operand.vmem [shape: bf16[256,32], index: 0, kind: input, shape index: {}]
  %s1 = inlined_call_operand.vmem [shape: f32[256,1], index: 1, kind: input, shape index: {}]
  %s2 = inlined_call_operand.vmem [shape: bf16[32,256], index: 2, kind: input, shape index: {}]
  %s3 = inlined_call_operand.vmem [shape: f32[1,256], index: 3, kind: input, shape index: {}]
  %s4 = inlined_call_operand.vmem [shape: bf16[256,192], index: 4, kind: input, shape index: {}]
  %s5 = inlined_call_operand.vmem [shape: f32[1,192], index: 5, kind: input, shape index: {}]
  %s6 = inlined_call_operand.vmem [shape: f32[1,64], index: 6, kind: input, shape index: {}]
  %s7 = inlined_call_operand.vmem [shape: bf16[64,256], index: 7, kind: input, shape index: {}]
  %s8 = inlined_call_operand.vmem [shape: f32[1,256], index: 8, kind: input, shape index: {}]
  %s9 = inlined_call_operand.vmem [shape: bf16[128,64], index: 9, kind: input, shape index: {}]
  %s10 = inlined_call_operand.vmem [shape: f32[1,64], index: 10, kind: input, shape index: {}]
  %s11 = inlined_call_operand.vmem [shape: bf16[64,8], index: 11, kind: input, shape index: {}]
  %s12 = inlined_call_operand.vmem [shape: f32[1,8], index: 12, kind: input, shape index: {}]
  %s13 = inlined_call_operand.vmem [shape: f32[256,8], index: 13, kind: output, shape index: {0}]
  %s14 = inlined_call_operand.hbm [shape: bf16[256,256], index: 14, kind: output, shape index: {1}]
  %s15 = inlined_call_operand.hbm [shape: bf16[256,256], index: 15, kind: output, shape index: {2}]
  %s16 = inlined_call_operand.vmem [shape: f32[256,1], index: 16, kind: output, shape index: {3}]
  %17 = xla_tuple %s13, %s14, %s15, %s16
  %s18 = sld [smem:[#allocation0]]
  $region109: #{tpu_custom_call.1} parent=0
    _
  %s20 = ssub.s32 1, %s18
  %s21 = scalar_select 0, %s20, %s18
  $region1: #{tpu_custom_call.1} parent=0
    #allocation2 [shape = 'u8[131072]{0}', space=vmem, size = 0x20000, scoped, tag = 'output window, operand 1']
    #allocation3 [shape = 's32[2]{0}', space=sflag, size = 0x8, scoped, tag = 'scoped memory for tpu_custom_call.1']
    #allocation4 [shape = 'u8[131072]{0}', space=vmem, size = 0x20000, scoped, tag = 'output window, operand 2']
    #allocation5 [shape = 's32[2]{0}', space=sflag, size = 0x8, scoped, tag = 'scoped memory for tpu_custom_call.1']
    %22 = vsyncpa [#allocation3], 0
    %s23 = scalar_lea.sflag [#allocation3], 1
    %24 = vsyncpa %s23, 0
    %25 = vsyncpa [#allocation5], 0
    %s26 = scalar_lea.sflag [#allocation5], 1
    %27 = vsyncpa %s26, 0
    loop: start=0, step=1, limit=4
    $region2: #{tpu_custom_call.1} parent=1 // loop_pre_header
      _
    $region3: #{tpu_custom_call.1} parent=1 // loop_header
      %s29 = sphi 0, %s33
      %p30 = scmp.ge.s32.totalorder %s29, 4
      %s39 = sphi 0, %s41
      %s42 = sphi 0, %s39
      %s43 = sphi 0, %s42
      %s59 = sphi 0, %s43
      %s65 = sphi 0, %s67
      %s68 = sphi 0, %s65
      %s69 = sphi 0, %s68
      %s85 = sphi 0, %s69
      %s89 = sphi 0, %s89
      %s91 = sphi 0, %s89
      %s92 = sphi 0, %s91
      %s106 = sphi 0, %s92
      %s110 = sphi 0, %s110
      %s112 = sphi 0, %s110
      %s113 = sphi 0, %s112
      %s127 = sphi 0, %s113
      %s131 = sphi 0, %s131
      %s133 = sphi 0, %s131
      %s134 = sphi 0, %s133
      %s148 = sphi 0, %s134
      %s152 = sphi 0, %s152
      %s154 = sphi 0, %s152
      %s155 = sphi 0, %s154
      %s169 = sphi 0, %s155
      %s173 = sphi 0, %s173
      %s175 = sphi 0, %s173
      %s176 = sphi 0, %s175
      %s190 = sphi 0, %s176
      %s194 = sphi 0, %s194
      %s196 = sphi 0, %s194
      %s197 = sphi 0, %s196
      %s211 = sphi 0, %s197
      %s215 = sphi 0, %s215
      %s217 = sphi 0, %s215
      %s218 = sphi 0, %s217
      %s232 = sphi 0, %s218
      %s236 = sphi 0, %s236
      %s238 = sphi 0, %s236
      %s239 = sphi 0, %s238
      %s253 = sphi 0, %s239
      %s257 = sphi 0, %s257
      %s259 = sphi 0, %s257
      %s260 = sphi 0, %s259
      %s274 = sphi 0, %s260
      %s278 = sphi 0, %s278
      %s280 = sphi 0, %s278
      %s281 = sphi 0, %s280
      %s295 = sphi 0, %s281
      %s299 = sphi 0, %s299
      %s301 = sphi 0, %s299
      %s302 = sphi 0, %s301
      %s316 = sphi 0, %s302
      %s322 = sphi 0, %s324
      %s325 = sphi 0, %s322
      %s326 = sphi 0, %s325
      %s342 = sphi 0, %s326
      %s348 = sphi 0, %s350
      %s351 = sphi 0, %s348
      %s352 = sphi 0, %s351
      %s368 = sphi 0, %s352
      %s374 = sphi 0, %s376
      %s377 = sphi 0, %s374
      %s378 = sphi 0, %s377
      %s394 = sphi 0, %s378
      %s400 = sphi 0, %s402
      %s403 = sphi 0, %s400
      %s404 = sphi 0, %s403
      %s420 = sphi 0, %s404
    $region4: #{tpu_custom_call.1} parent=1 // loop_header_branch
      %32 = sbr.rel (%p30) target = $region8
    $region5: #{tpu_custom_call.1} parent=1 // loop_body
      %s34 = ssub.s32 %s29, 1
      %s35 = ssub.s32 %s29, 2
      %s36 = sadd.s32 %s29, 1
      %s37 = ssub.s32 %s29, %s36
      %p38 = scmp.eq.s32.totalorder %s37, 0
      %s40 = sadd.s32 %s39, 1
      %s41 = scalar_select %p38, %s39, %s40
      %p44 = pneg %p38
      %p45 = scmp.eq.s32.totalorder %s29, 1
      %p46 = por %p44, %p45
      %p47 = scmp.ne.s32.totalorder %s39, %s42
      %p48 = scmp.eq.s32.totalorder %s29, 0
      %p49 = por %p47, %p48
      %p50 = scmp.ne.s32.totalorder %s39, %s42
      %p51 = scmp.eq.s32.totalorder %s34, 1
      %p52 = por %p50, %p51
      %p53 = scmp.ne.s32.totalorder %s42, %s43
      %p54 = scmp.eq.s32.totalorder %s34, 0
      %p55 = por %p53, %p54
      %p56 = scmp.ne.s32.totalorder %s42, %s43
      %p57 = scmp.eq.s32.totalorder %s35, 1
      %p58 = por %p56, %p57
      %p60 = scmp.ne.s32.totalorder %s43, %s59
      %p61 = scmp.eq.s32.totalorder %s35, 0
      %p62 = por %p60, %p61
      %s63 = ssub.s32 %s29, %s36
      %p64 = scmp.eq.s32.totalorder %s63, 0
      %s66 = sadd.s32 %s65, 1
      %s67 = scalar_select %p64, %s65, %s66
      %p70 = pneg %p64
      %p71 = scmp.eq.s32.totalorder %s29, 1
      %p72 = por %p70, %p71
      %p73 = scmp.ne.s32.totalorder %s65, %s68
      %p74 = scmp.eq.s32.totalorder %s29, 0
      %p75 = por %p73, %p74
      %p76 = scmp.ne.s32.totalorder %s65, %s68
      %p77 = scmp.eq.s32.totalorder %s34, 1
      %p78 = por %p76, %p77
      %p79 = scmp.ne.s32.totalorder %s68, %s69
      %p80 = scmp.eq.s32.totalorder %s34, 0
      %p81 = por %p79, %p80
      %p82 = scmp.ne.s32.totalorder %s68, %s69
      %p83 = scmp.eq.s32.totalorder %s35, 1
      %p84 = por %p82, %p83
      %p86 = scmp.ne.s32.totalorder %s69, %s85
      %p87 = scmp.eq.s32.totalorder %s35, 0
      %p88 = por %p86, %p87
      %s90 = sadd.s32 %s89, 1
      %p93 = scmp.eq.s32.totalorder %s29, 1
      %p94 = scmp.ne.s32.totalorder %s89, %s91
      %p95 = scmp.eq.s32.totalorder %s29, 0
      %p96 = por %p94, %p95
      %p97 = scmp.ne.s32.totalorder %s89, %s91
      %p98 = scmp.eq.s32.totalorder %s34, 1
      %p99 = por %p97, %p98
      %p100 = scmp.ne.s32.totalorder %s91, %s92
      %p101 = scmp.eq.s32.totalorder %s34, 0
      %p102 = por %p100, %p101
      %p103 = scmp.ne.s32.totalorder %s91, %s92
      %p104 = scmp.eq.s32.totalorder %s35, 1
      %p105 = por %p103, %p104
      %p107 = scmp.ne.s32.totalorder %s92, %s106
      %p108 = scmp.eq.s32.totalorder %s35, 0
      %p109 = por %p107, %p108
      %s111 = sadd.s32 %s110, 1
      %p114 = scmp.eq.s32.totalorder %s29, 1
      %p115 = scmp.ne.s32.totalorder %s110, %s112
      %p116 = scmp.eq.s32.totalorder %s29, 0
      %p117 = por %p115, %p116
      %p118 = scmp.ne.s32.totalorder %s110, %s112
      %p119 = scmp.eq.s32.totalorder %s34, 1
      %p120 = por %p118, %p119
      %p121 = scmp.ne.s32.totalorder %s112, %s113
      %p122 = scmp.eq.s32.totalorder %s34, 0
      %p123 = por %p121, %p122
      %p124 = scmp.ne.s32.totalorder %s112, %s113
      %p125 = scmp.eq.s32.totalorder %s35, 1
      %p126 = por %p124, %p125
      %p128 = scmp.ne.s32.totalorder %s113, %s127
      %p129 = scmp.eq.s32.totalorder %s35, 0
      %p130 = por %p128, %p129
      %s132 = sadd.s32 %s131, 1
      %p135 = scmp.eq.s32.totalorder %s29, 1
      %p136 = scmp.ne.s32.totalorder %s131, %s133
      %p137 = scmp.eq.s32.totalorder %s29, 0
      %p138 = por %p136, %p137
      %p139 = scmp.ne.s32.totalorder %s131, %s133
      %p140 = scmp.eq.s32.totalorder %s34, 1
      %p141 = por %p139, %p140
      %p142 = scmp.ne.s32.totalorder %s133, %s134
      %p143 = scmp.eq.s32.totalorder %s34, 0
      %p144 = por %p142, %p143
      %p145 = scmp.ne.s32.totalorder %s133, %s134
      %p146 = scmp.eq.s32.totalorder %s35, 1
      %p147 = por %p145, %p146
      %p149 = scmp.ne.s32.totalorder %s134, %s148
      %p150 = scmp.eq.s32.totalorder %s35, 0
      %p151 = por %p149, %p150
      %s153 = sadd.s32 %s152, 1
      %p156 = scmp.eq.s32.totalorder %s29, 1
      %p157 = scmp.ne.s32.totalorder %s152, %s154
      %p158 = scmp.eq.s32.totalorder %s29, 0
      %p159 = por %p157, %p158
      %p160 = scmp.ne.s32.totalorder %s152, %s154
      %p161 = scmp.eq.s32.totalorder %s34, 1
      %p162 = por %p160, %p161
      %p163 = scmp.ne.s32.totalorder %s154, %s155
      %p164 = scmp.eq.s32.totalorder %s34, 0
      %p165 = por %p163, %p164
      %p166 = scmp.ne.s32.totalorder %s154, %s155
      %p167 = scmp.eq.s32.totalorder %s35, 1
      %p168 = por %p166, %p167
      %p170 = scmp.ne.s32.totalorder %s155, %s169
      %p171 = scmp.eq.s32.totalorder %s35, 0
      %p172 = por %p170, %p171
      %s174 = sadd.s32 %s173, 1
      %p177 = scmp.eq.s32.totalorder %s29, 1
      %p178 = scmp.ne.s32.totalorder %s173, %s175
      %p179 = scmp.eq.s32.totalorder %s29, 0
      %p180 = por %p178, %p179
      %p181 = scmp.ne.s32.totalorder %s173, %s175
      %p182 = scmp.eq.s32.totalorder %s34, 1
      %p183 = por %p181, %p182
      %p184 = scmp.ne.s32.totalorder %s175, %s176
      %p185 = scmp.eq.s32.totalorder %s34, 0
      %p186 = por %p184, %p185
      %p187 = scmp.ne.s32.totalorder %s175, %s176
      %p188 = scmp.eq.s32.totalorder %s35, 1
      %p189 = por %p187, %p188
      %p191 = scmp.ne.s32.totalorder %s176, %s190
      %p192 = scmp.eq.s32.totalorder %s35, 0
      %p193 = por %p191, %p192
      %s195 = sadd.s32 %s194, 1
      %p198 = scmp.eq.s32.totalorder %s29, 1
      %p199 = scmp.ne.s32.totalorder %s194, %s196
      %p200 = scmp.eq.s32.totalorder %s29, 0
      %p201 = por %p199, %p200
      %p202 = scmp.ne.s32.totalorder %s194, %s196
      %p203 = scmp.eq.s32.totalorder %s34, 1
      %p204 = por %p202, %p203
      %p205 = scmp.ne.s32.totalorder %s196, %s197
      %p206 = scmp.eq.s32.totalorder %s34, 0
      %p207 = por %p205, %p206
      %p208 = scmp.ne.s32.totalorder %s196, %s197
      %p209 = scmp.eq.s32.totalorder %s35, 1
      %p210 = por %p208, %p209
      %p212 = scmp.ne.s32.totalorder %s197, %s211
      %p213 = scmp.eq.s32.totalorder %s35, 0
      %p214 = por %p212, %p213
      %s216 = sadd.s32 %s215, 1
      %p219 = scmp.eq.s32.totalorder %s29, 1
      %p220 = scmp.ne.s32.totalorder %s215, %s217
      %p221 = scmp.eq.s32.totalorder %s29, 0
      %p222 = por %p220, %p221
      %p223 = scmp.ne.s32.totalorder %s215, %s217
      %p224 = scmp.eq.s32.totalorder %s34, 1
      %p225 = por %p223, %p224
      %p226 = scmp.ne.s32.totalorder %s217, %s218
      %p227 = scmp.eq.s32.totalorder %s34, 0
      %p228 = por %p226, %p227
      %p229 = scmp.ne.s32.totalorder %s217, %s218
      %p230 = scmp.eq.s32.totalorder %s35, 1
      %p231 = por %p229, %p230
      %p233 = scmp.ne.s32.totalorder %s218, %s232
      %p234 = scmp.eq.s32.totalorder %s35, 0
      %p235 = por %p233, %p234
      %s237 = sadd.s32 %s236, 1
      %p240 = scmp.eq.s32.totalorder %s29, 1
      %p241 = scmp.ne.s32.totalorder %s236, %s238
      %p242 = scmp.eq.s32.totalorder %s29, 0
      %p243 = por %p241, %p242
      %p244 = scmp.ne.s32.totalorder %s236, %s238
      %p245 = scmp.eq.s32.totalorder %s34, 1
      %p246 = por %p244, %p245
      %p247 = scmp.ne.s32.totalorder %s238, %s239
      %p248 = scmp.eq.s32.totalorder %s34, 0
      %p249 = por %p247, %p248
      %p250 = scmp.ne.s32.totalorder %s238, %s239
      %p251 = scmp.eq.s32.totalorder %s35, 1
      %p252 = por %p250, %p251
      %p254 = scmp.ne.s32.totalorder %s239, %s253
      %p255 = scmp.eq.s32.totalorder %s35, 0
      %p256 = por %p254, %p255
      %s258 = sadd.s32 %s257, 1
      %p261 = scmp.eq.s32.totalorder %s29, 1
      %p262 = scmp.ne.s32.totalorder %s257, %s259
      %p263 = scmp.eq.s32.totalorder %s29, 0
      %p264 = por %p262, %p263
      %p265 = scmp.ne.s32.totalorder %s257, %s259
      %p266 = scmp.eq.s32.totalorder %s34, 1
      %p267 = por %p265, %p266
      %p268 = scmp.ne.s32.totalorder %s259, %s260
      %p269 = scmp.eq.s32.totalorder %s34, 0
      %p270 = por %p268, %p269
      %p271 = scmp.ne.s32.totalorder %s259, %s260
      %p272 = scmp.eq.s32.totalorder %s35, 1
      %p273 = por %p271, %p272
      %p275 = scmp.ne.s32.totalorder %s260, %s274
      %p276 = scmp.eq.s32.totalorder %s35, 0
      %p277 = por %p275, %p276
      %s279 = sadd.s32 %s278, 1
      %p282 = scmp.eq.s32.totalorder %s29, 1
      %p283 = scmp.ne.s32.totalorder %s278, %s280
      %p284 = scmp.eq.s32.totalorder %s29, 0
      %p285 = por %p283, %p284
      %p286 = scmp.ne.s32.totalorder %s278, %s280
      %p287 = scmp.eq.s32.totalorder %s34, 1
      %p288 = por %p286, %p287
      %p289 = scmp.ne.s32.totalorder %s280, %s281
      %p290 = scmp.eq.s32.totalorder %s34, 0
      %p291 = por %p289, %p290
      %p292 = scmp.ne.s32.totalorder %s280, %s281
      %p293 = scmp.eq.s32.totalorder %s35, 1
      %p294 = por %p292, %p293
      %p296 = scmp.ne.s32.totalorder %s281, %s295
      %p297 = scmp.eq.s32.totalorder %s35, 0
      %p298 = por %p296, %p297
      %s300 = sadd.s32 %s299, 1
      %p303 = scmp.eq.s32.totalorder %s29, 1
      %p304 = scmp.ne.s32.totalorder %s299, %s301
      %p305 = scmp.eq.s32.totalorder %s29, 0
      %p306 = por %p304, %p305
      %p307 = scmp.ne.s32.totalorder %s299, %s301
      %p308 = scmp.eq.s32.totalorder %s34, 1
      %p309 = por %p307, %p308
      %p310 = scmp.ne.s32.totalorder %s301, %s302
      %p311 = scmp.eq.s32.totalorder %s34, 0
      %p312 = por %p310, %p311
      %p313 = scmp.ne.s32.totalorder %s301, %s302
      %p314 = scmp.eq.s32.totalorder %s35, 1
      %p315 = por %p313, %p314
      %p317 = scmp.ne.s32.totalorder %s302, %s316
      %p318 = scmp.eq.s32.totalorder %s35, 0
      %p319 = por %p317, %p318
      %s320 = ssub.s32 %s29, %s36
      %p321 = scmp.eq.s32.totalorder %s320, 0
      %s323 = sadd.s32 %s322, 1
      %s324 = scalar_select %p321, %s322, %s323
      %p327 = pneg %p321
      %p328 = scmp.eq.s32.totalorder %s29, 1
      %p329 = por %p327, %p328
      %p330 = scmp.ne.s32.totalorder %s322, %s325
      %p331 = scmp.eq.s32.totalorder %s29, 0
      %p332 = por %p330, %p331
      %p333 = scmp.ne.s32.totalorder %s322, %s325
      %p334 = scmp.eq.s32.totalorder %s34, 1
      %p335 = por %p333, %p334
      %p336 = scmp.ne.s32.totalorder %s325, %s326
      %p337 = scmp.eq.s32.totalorder %s34, 0
      %p338 = por %p336, %p337
      %p339 = scmp.ne.s32.totalorder %s325, %s326
      %p340 = scmp.eq.s32.totalorder %s35, 1
      %p341 = por %p339, %p340
      %p343 = scmp.ne.s32.totalorder %s326, %s342
      %p344 = scmp.eq.s32.totalorder %s35, 0
      %p345 = por %p343, %p344
      %s346 = ssub.s32 %s29, %s36
      %p347 = scmp.eq.s32.totalorder %s346, 0
      %s349 = sadd.s32 %s348, 1
      %s350 = scalar_select %p347, %s348, %s349
      %p353 = pneg %p347
      %p354 = scmp.eq.s32.totalorder %s29, 1
      %p355 = por %p353, %p354
      %p356 = scmp.ne.s32.totalorder %s348, %s351
      %p357 = scmp.eq.s32.totalorder %s29, 0
      %p358 = por %p356, %p357
      %p359 = scmp.ne.s32.totalorder %s348, %s351
      %p360 = scmp.eq.s32.totalorder %s34, 1
      %p361 = por %p359, %p360
      %p362 = scmp.ne.s32.totalorder %s351, %s352
      %p363 = scmp.eq.s32.totalorder %s34, 0
      %p364 = por %p362, %p363
      %p365 = scmp.ne.s32.totalorder %s351, %s352
      %p366 = scmp.eq.s32.totalorder %s35, 1
      %p367 = por %p365, %p366
      %p369 = scmp.ne.s32.totalorder %s352, %s368
      %p370 = scmp.eq.s32.totalorder %s35, 0
      %p371 = por %p369, %p370
      %s372 = ssub.s32 %s29, %s36
      %p373 = scmp.eq.s32.totalorder %s372, 0
      %s375 = sadd.s32 %s374, 1
      %s376 = scalar_select %p373, %s374, %s375
      %p379 = pneg %p373
      %p380 = scmp.eq.s32.totalorder %s29, 1
      %p381 = por %p379, %p380
      %p382 = scmp.ne.s32.totalorder %s374, %s377
      %p383 = scmp.eq.s32.totalorder %s29, 0
      %p384 = por %p382, %p383
      %p385 = scmp.ne.s32.totalorder %s374, %s377
      %p386 = scmp.eq.s32.totalorder %s34, 1
      %p387 = por %p385, %p386
      %p388 = scmp.ne.s32.totalorder %s377, %s378
      %p389 = scmp.eq.s32.totalorder %s34, 0
      %p390 = por %p388, %p389
      %p391 = scmp.ne.s32.totalorder %s377, %s378
      %p392 = scmp.eq.s32.totalorder %s35, 1
      %p393 = por %p391, %p392
      %p395 = scmp.ne.s32.totalorder %s378, %s394
      %p396 = scmp.eq.s32.totalorder %s35, 0
      %p397 = por %p395, %p396
      %s398 = ssub.s32 %s29, %s36
      %p399 = scmp.eq.s32.totalorder %s398, 0
      %s401 = sadd.s32 %s400, 1
      %s402 = scalar_select %p399, %s400, %s401
      %p405 = pneg %p399
      %p406 = scmp.eq.s32.totalorder %s29, 1
      %p407 = por %p405, %p406
      %p408 = scmp.ne.s32.totalorder %s400, %s403
      %p409 = scmp.eq.s32.totalorder %s29, 0
      %p410 = por %p408, %p409
      %p411 = scmp.ne.s32.totalorder %s400, %s403
      %p412 = scmp.eq.s32.totalorder %s34, 1
      %p413 = por %p411, %p412
      %p414 = scmp.ne.s32.totalorder %s403, %s404
      %p415 = scmp.eq.s32.totalorder %s34, 0
      %p416 = por %p414, %p415
      %p417 = scmp.ne.s32.totalorder %s403, %s404
      %p418 = scmp.eq.s32.totalorder %s35, 1
      %p419 = por %p417, %p418
      %p421 = scmp.ne.s32.totalorder %s404, %s420
      %p422 = scmp.eq.s32.totalorder %s35, 0
      %p423 = por %p421, %p422
      %p424 = scmp.le.s32.totalorder 1, %s29
      %p425 = scmp.lt.s32.totalorder %s29, 3
      %p426 = pnand %p424, %p425
      %p427 = pneg %p426
      // Predicated region
      $region9: #{tpu_custom_call.1} parent=5 // pred_check
        _
      $region10: #{tpu_custom_call.1} parent=5 // pred_check_branch
        %429 = sbr.rel (%p426) target = $region12
      $region11: #{tpu_custom_call.1} parent=5 // pred_region
        %s430 = ssub.s32 %s29, 1
        // Predicated region
        $region13: #{tpu_custom_call.1} parent=11 // pred_check
          %p431 = pneg %p102
        $region14: #{tpu_custom_call.1} parent=11 // pred_check_branch
          %433 = sbr.rel (%p431) target = $region16
        $region15: #{tpu_custom_call.1} parent=11 // pred_region
          _
        $region16: #{tpu_custom_call.1} parent=11 // pred_fallthru
          _
        // Predicated region
        $region17: #{tpu_custom_call.1} parent=11 // pred_check
          %p434 = pneg %p123
        $region18: #{tpu_custom_call.1} parent=11 // pred_check_branch
          %436 = sbr.rel (%p434) target = $region20
        $region19: #{tpu_custom_call.1} parent=11 // pred_region
          _
        $region20: #{tpu_custom_call.1} parent=11 // pred_fallthru
          _
        // Predicated region
        $region21: #{tpu_custom_call.1} parent=11 // pred_check
          %p437 = pneg %p144
        $region22: #{tpu_custom_call.1} parent=11 // pred_check_branch
          %439 = sbr.rel (%p437) target = $region24
        $region23: #{tpu_custom_call.1} parent=11 // pred_region
          _
        $region24: #{tpu_custom_call.1} parent=11 // pred_fallthru
          _
        // Predicated region
        $region25: #{tpu_custom_call.1} parent=11 // pred_check
          %p440 = pneg %p165
        $region26: #{tpu_custom_call.1} parent=11 // pred_check_branch
          %442 = sbr.rel (%p440) target = $region28
        $region27: #{tpu_custom_call.1} parent=11 // pred_region
          _
        $region28: #{tpu_custom_call.1} parent=11 // pred_fallthru
          _
        // Predicated region
        $region29: #{tpu_custom_call.1} parent=11 // pred_check
          %p443 = pneg %p186
        $region30: #{tpu_custom_call.1} parent=11 // pred_check_branch
          %445 = sbr.rel (%p443) target = $region32
        $region31: #{tpu_custom_call.1} parent=11 // pred_region
          _
        $region32: #{tpu_custom_call.1} parent=11 // pred_fallthru
          _
        // Predicated region
        $region33: #{tpu_custom_call.1} parent=11 // pred_check
          %p446 = pneg %p207
        $region34: #{tpu_custom_call.1} parent=11 // pred_check_branch
          %448 = sbr.rel (%p446) target = $region36
        $region35: #{tpu_custom_call.1} parent=11 // pred_region
          _
        $region36: #{tpu_custom_call.1} parent=11 // pred_fallthru
          _
        // Predicated region
        $region37: #{tpu_custom_call.1} parent=11 // pred_check
          %p449 = pneg %p228
        $region38: #{tpu_custom_call.1} parent=11 // pred_check_branch
          %451 = sbr.rel (%p449) target = $region40
        $region39: #{tpu_custom_call.1} parent=11 // pred_region
          _
        $region40: #{tpu_custom_call.1} parent=11 // pred_fallthru
          _
        // Predicated region
        $region41: #{tpu_custom_call.1} parent=11 // pred_check
          %p452 = pneg %p249
        $region42: #{tpu_custom_call.1} parent=11 // pred_check_branch
          %454 = sbr.rel (%p452) target = $region44
        $region43: #{tpu_custom_call.1} parent=11 // pred_region
          _
        $region44: #{tpu_custom_call.1} parent=11 // pred_fallthru
          _
        // Predicated region
        $region45: #{tpu_custom_call.1} parent=11 // pred_check
          %p455 = pneg %p270
        $region46: #{tpu_custom_call.1} parent=11 // pred_check_branch
          %457 = sbr.rel (%p455) target = $region48
        $region47: #{tpu_custom_call.1} parent=11 // pred_region
          _
        $region48: #{tpu_custom_call.1} parent=11 // pred_fallthru
          _
        // Predicated region
        $region49: #{tpu_custom_call.1} parent=11 // pred_check
          %p458 = pneg %p291
        $region50: #{tpu_custom_call.1} parent=11 // pred_check_branch
          %460 = sbr.rel (%p458) target = $region52
        $region51: #{tpu_custom_call.1} parent=11 // pred_region
          _
        $region52: #{tpu_custom_call.1} parent=11 // pred_fallthru
          _
        // Predicated region
        $region53: #{tpu_custom_call.1} parent=11 // pred_check
          %p461 = pneg %p312
        $region54: #{tpu_custom_call.1} parent=11 // pred_check_branch
          %463 = sbr.rel (%p461) target = $region56
        $region55: #{tpu_custom_call.1} parent=11 // pred_region
          _
        $region56: #{tpu_custom_call.1} parent=11 // pred_fallthru
          _
      $region12: #{tpu_custom_call.1} parent=5 // pred_fallthru
        _
      %p464 = scmp.lt.s32.totalorder %s29, 2
      // Predicated region
      $region57: #{tpu_custom_call.1} parent=5 // pred_check
        %p465 = pneg %p464
      $region58: #{tpu_custom_call.1} parent=5 // pred_check_branch
        %467 = sbr.rel (%p465) target = $region60
      $region59: #{tpu_custom_call.1} parent=5 // pred_region
        // Predicated region
        $region61: #{tpu_custom_call.1} parent=59 // pred_check
          %p468 = pneg %p49
        $region62: #{tpu_custom_call.1} parent=59 // pred_check_branch
          %470 = sbr.rel (%p468) target = $region64
        $region63: #{tpu_custom_call.1} parent=59 // pred_region
          %s471 = smul.u32 16, %s29
          %p472 = scmp.lt.s32.totalorder %s471, 31
          %s473 = scalar_select %p472, %s471, 31
          %s474 = smul.addr %s473, 4
          %s475 = scalar_lea.vmem %s0, %s474
          %s476 = smul.u32 16, %s29
        $region64: #{tpu_custom_call.1} parent=59 // pred_fallthru
          _
        // Predicated region
        $region65: #{tpu_custom_call.1} parent=59 // pred_check
          %p477 = pneg %p75
        $region66: #{tpu_custom_call.1} parent=59 // pred_check_branch
          %479 = sbr.rel (%p477) target = $region68
        $region67: #{tpu_custom_call.1} parent=59 // pred_region
          %s480 = smul.u32 16, %s29
          %p481 = scmp.lt.s32.totalorder %s480, 31
          %s482 = scalar_select %p481, %s480, 31
          %s483 = smul.addr %s482, 8
          %s484 = scalar_lea.vmem %s1, %s483
          %s485 = smul.u32 16, %s29
        $region68: #{tpu_custom_call.1} parent=59 // pred_fallthru
          _
      $region60: #{tpu_custom_call.1} parent=5 // pred_fallthru
        _
      %p486 = scmp.le.s32.totalorder 1, %s29
      %p487 = scmp.lt.s32.totalorder %s29, 3
      %p488 = pnand %p486, %p487
      %p489 = pneg %p488
      // Predicated region
      $region69: #{tpu_custom_call.1} parent=5 // pred_check
        _
      $region70: #{tpu_custom_call.1} parent=5 // pred_check_branch
        %491 = sbr.rel (%p488) target = $region72
      $region71: #{tpu_custom_call.1} parent=5 // pred_region
        %s492 = ssub.s32 %s29, 1
        %s493 = smul.u32 16, %s34
        %p494 = scmp.lt.s32.totalorder %s493, 31
        %s495 = scalar_select %p494, %s493, 31
        %s496 = smul.addr %s495, 4
        %s497 = scalar_lea.vmem %s0, %s496
        %p498 = pneg %p55
        %p499 = pneg %p52
        %s500 = smul.u32 16, %s34
        %p501 = scmp.lt.s32.totalorder %s500, 31
        %s502 = scalar_select %p501, %s500, 31
        %s503 = smul.addr %s502, 8
        %s504 = scalar_lea.vmem %s1, %s503
        %p505 = pneg %p81
        %p506 = pneg %p78
        %p507 = pneg %p102
        %p508 = pneg %p99
        %p509 = pneg %p123
        %p510 = pneg %p120
        %p511 = pneg %p144
        %p512 = pneg %p141
        %p513 = pneg %p165
        %p514 = pneg %p162
        %p515 = pneg %p186
        %p516 = pneg %p183
        %p517 = pneg %p207
        %p518 = pneg %p204
        %p519 = pneg %p228
        %p520 = pneg %p225
        %p521 = pneg %p249
        %p522 = pneg %p246
        %p523 = pneg %p270
        %p524 = pneg %p267
        %p525 = pneg %p291
        %p526 = pneg %p288
        %p527 = pneg %p312
        %p528 = pneg %p309
        %p529 = pneg %p338
        %p530 = pneg %p335
        %s531 = smul.u32 16, %s34
        %p532 = scmp.lt.s32.totalorder %s531, 31
        %s533 = scalar_select %p532, %s531, 31
        %s534 = smul.addr %s533, 8
        %s535 = scalar_lea.vmem %s13, %s534
        %p536 = pneg %p364
        %p537 = pneg %p361
        %s538 = sand.u32 %s351, 1
        %s539 = scalar_lea.sflag [#allocation3], %s538
        %s540 = sand.u32 %s351, 1
        %s541 = smul.addr %s540, 128
        %s542 = scalar_lea.vmem [#allocation2], %s541
        %p543 = pneg %p390
        %p544 = pneg %p387
        %s545 = sand.u32 %s377, 1
        %s546 = scalar_lea.sflag [#allocation5], %s545
        %s547 = sand.u32 %s377, 1
        %s548 = smul.addr %s547, 128
        %s549 = scalar_lea.vmem [#allocation4], %s548
        %p550 = pneg %p416
        %p551 = pneg %p413
        %s552 = smul.u32 16, %s34
        %p553 = scmp.lt.s32.totalorder %s552, 31
        %s554 = scalar_select %p553, %s552, 31
        %s555 = smul.addr %s554, 8
        %s556 = scalar_lea.vmem %s16, %s555
        %s557 = smul.u32 16, %s34
        %p558 = scmp.lt.s32.totalorder %s557, 31
        %s559 = scalar_select %p558, %s557, 31
        %s560 = smul.addr %s559, 4
        %s561 = scalar_lea.vmem %s0, %s560
        %s562 = smul.u32 16, %s34
        %s563 = smul.u32 16, %s34
        %p564 = scmp.lt.s32.totalorder %s563, 31
        %s565 = scalar_select %p564, %s563, 31
        %s566 = smul.addr %s565, 8
        %s567 = scalar_lea.vmem %s1, %s566
        %s568 = smul.u32 16, %s34
        %s569 = smul.u32 16, %s34
        %p570 = scmp.lt.s32.totalorder %s569, 31
        %s571 = scalar_select %p570, %s569, 31
        %s572 = smul.addr %s571, 8
        %s573 = scalar_lea.vmem %s13, %s572
        %s574 = smul.u32 16, %s34
        %s575 = smul.u32 16, %s34
        %s576 = smul.u32 16, %s34
        %s577 = smul.u32 16, %s34
        %p578 = scmp.lt.s32.totalorder %s577, 31
        %s579 = scalar_select %p578, %s577, 31
        %s580 = smul.addr %s579, 8
        %s581 = scalar_lea.vmem %s16, %s580
        %s582 = smul.u32 16, %s34
        %v584 = vld [vmem:[%s561] sm:$0xf]
        %v585 = vld [vmem:[%s561 + $0x4] sm:$0xf]
        %v586 = vld [vmem:[%s561 + $0x8] sm:$0xf]
        %v587 = vld [vmem:[%s561 + $0xc] sm:$0xf]
        %v588 = vld [vmem:[%s561 + $0x10] sm:$0xf]
        %v589 = vld [vmem:[%s561 + $0x14] sm:$0xf]
        %v590 = vld [vmem:[%s561 + $0x18] sm:$0xf]
        %v591 = vld [vmem:[%s561 + $0x1c] sm:$0xf]
        %v592 = vld [vmem:[%s561 + $0x20] sm:$0xf]
        %v593 = vld [vmem:[%s561 + $0x24] sm:$0xf]
        %v594 = vld [vmem:[%s561 + $0x28] sm:$0xf]
        %v595 = vld [vmem:[%s561 + $0x2c] sm:$0xf]
        %v596 = vld [vmem:[%s561 + $0x30] sm:$0xf]
        %v597 = vld [vmem:[%s561 + $0x34] sm:$0xf]
        %v598 = vld [vmem:[%s561 + $0x38] sm:$0xf]
        %v599 = vld [vmem:[%s561 + $0x3c] sm:$0xf]
        %v600 = vld [vmem:[%s2] sm:$0xff]
        %v601 = vld [vmem:[%s2 + $0x8] sm:$0xff]
        %v602 = vld [vmem:[%s2 + $0x10] sm:$0xff]
        %v603 = vld [vmem:[%s2 + $0x18] sm:$0xff]
        %v604 = vld [vmem:[%s3] sm:$0x3]
        %v606 = vlaneseq
        %v607 = vshrl.u32 %v606, 7
        %v608 = vsub.s32 0, %v607
        %v609 = vrot.slane %v604, %v608
        %v610 = vlaneseq
        %v611 = vshrl.u32 %v610, 7
        %v612 = vsub.s32 1, %v611
        %v613 = vrot.slane %v604, %v612
        %v632 = vunpack.c.l.b16 %v584
        %v633 = vunpack.c.l.b16 %v585
        %v634 = vunpack.c.l.b16 %v586
        %v635 = vunpack.c.l.b16 %v587
        %v636 = vunpack.c.l.b16 %v588
        %v637 = vunpack.c.l.b16 %v589
        %v638 = vunpack.c.l.b16 %v590
        %v639 = vunpack.c.l.b16 %v591
        %v640 = vunpack.c.l.b16 %v592
        %v641 = vunpack.c.l.b16 %v593
        %v642 = vunpack.c.l.b16 %v594
        %v643 = vunpack.c.l.b16 %v595
        %v644 = vunpack.c.l.b16 %v596
        %v645 = vunpack.c.l.b16 %v597
        %v646 = vunpack.c.l.b16 %v598
        %v647 = vunpack.c.l.b16 %v599
        %v648 = vpack.c.b16 %v633, %v632
        %v649 = vpack.c.b16 %v635, %v634
        %v650 = vpack.c.b16 %v637, %v636
        %v651 = vpack.c.b16 %v639, %v638
        %v652 = vpack.c.b16 %v641, %v640
        %v653 = vpack.c.b16 %v643, %v642
        %v654 = vpack.c.b16 %v645, %v644
        %v655 = vpack.c.b16 %v647, %v646
        %v660 = vunpack.c.l.b16 %v600
        %v661 = vunpack.c.h.b16 %v600
        %v662 = vunpack.c.l.b16 %v601
        %v663 = vunpack.c.h.b16 %v601
        %v664 = vunpack.c.l.b16 %v602
        %v665 = vunpack.c.h.b16 %v602
        %v666 = vunpack.c.l.b16 %v603
        %v667 = vunpack.c.h.b16 %v603
        %v668 = vpack.c.b16 %v662, %v660
        %v669 = vpack.c.b16 %v663, %v661
        %v670 = vpack.c.b16 %v666, %v664
        %v671 = vpack.c.b16 %v667, %v665
        %vm676 = vcmask 261120
        %v678 = vsel %vm676, %v648, 0
        %v681 = vsel %vm676, %v649, 0
        %v684 = vsel %vm676, %v650, 0
        %v687 = vsel %vm676, %v651, 0
        %v690 = vsel %vm676, %v652, 0
        %v693 = vsel %vm676, %v653, 0
        %v696 = vsel %vm676, %v654, 0
        %v699 = vsel %vm676, %v655, 0
        %701 = vmatprep.subr.bf16.mxu0 %v669
        %702 = vmatpush1.bf16.msra.mxu0 %v668
        %703 = vmatprep.subr.bf16.mxu0 %v671
        %704 = vmatpush1.bf16.msra.mxu0 %v670
        %705 = vmatprep.subr.bf16.mxu0 0
        %706 = vmatpush1.bf16.msra.mxu0 0
        %707 = vmatprep.subr.bf16.mxu0 0
        %708 = vmatpush1.bf16.msra.mxu0 0
        %709 = vmatprep.subr.bf16.mxu0 0
        %710 = vmatpush1.bf16.msra.mxu0 0
        %711 = vmatprep.subr.bf16.mxu0 0
        %712 = vmatpush1.bf16.msra.mxu0 0
        %713 = vmatprep.subr.bf16.mxu0 0
        %714 = vmatpush1.bf16.msra.mxu0 0
        %715 = vmatprep.subr.bf16.mxu0 0
        %716 = vmatpush1.bf16.msra.mxu0 0
        %717 = vmatprep.subr.bf16.mxu0 0
        %718 = vmatpush1.bf16.msra.mxu0 0
        %719 = vmatprep.subr.bf16.mxu0 0
        %720 = vmatpush1.bf16.msra.mxu0 0
        %721 = vmatprep.subr.bf16.mxu0 0
        %722 = vmatpush1.bf16.msra.mxu0 0
        %723 = vmatprep.subr.bf16.mxu0 0
        %724 = vmatpush1.bf16.msra.mxu0 0
        %725 = vmatprep.subr.bf16.mxu0 0
        %726 = vmatpush1.bf16.msra.mxu0 0
        %727 = vmatprep.subr.bf16.mxu0 0
        %728 = vmatpush1.bf16.msra.mxu0 0
        %729 = vmatprep.subr.bf16.mxu0 0
        %730 = vmatpush1.bf16.msra.mxu0 0
        %731 = vmatprep.subr.bf16.mxu0 0
        %732 = vmatpush1.bf16.msra.mxu0 0
        %733 = vmatprep.mubr.bf16.mxu0 0
        %734 = vmatmul.mubr.bf16.gmra.mrb[0].mxu0 %v678
        %v735 = vpop.f32.mrb[0].mxu0
        %v736 = vadd.f32 %v609, %v735
        %v737 = vpop.f32.mrb[0].mxu0
        %v738 = vadd.f32 %v613, %v737
        %v739 = vpop.f32.mrb[0].mxu0
        %v740 = vadd.f32 %v609, %v739
        %v741 = vpop.f32.mrb[0].mxu0
        %v742 = vadd.f32 %v613, %v741
        %743 = vmatprep.mubr.bf16.mxu0 0
        %744 = vmatmul.mubr.bf16.gmra.mrb[0].mxu0 %v681
        %v745 = vpop.f32.mrb[0].mxu0
        %v746 = vadd.f32 %v609, %v745
        %v747 = vpop.f32.mrb[0].mxu0
        %v748 = vadd.f32 %v613, %v747
        %v749 = vpop.f32.mrb[0].mxu0
        %v750 = vadd.f32 %v609, %v749
        %v751 = vpop.f32.mrb[0].mxu0
        %v752 = vadd.f32 %v613, %v751
        %753 = vmatprep.mubr.bf16.mxu0 0
        %754 = vmatmul.mubr.bf16.gmra.mrb[0].mxu0 %v684
        %v755 = vpop.f32.mrb[0].mxu0
        %v756 = vadd.f32 %v609, %v755
        %v757 = vpop.f32.mrb[0].mxu0
        %v758 = vadd.f32 %v613, %v757
        %v759 = vpop.f32.mrb[0].mxu0
        %v760 = vadd.f32 %v609, %v759
        %v761 = vpop.f32.mrb[0].mxu0
        %v762 = vadd.f32 %v613, %v761
        %763 = vmatprep.mubr.bf16.mxu0 0
        %764 = vmatmul.mubr.bf16.gmra.mrb[0].mxu0 %v687
        %v765 = vpop.f32.mrb[0].mxu0
        %v766 = vadd.f32 %v609, %v765
        %v767 = vpop.f32.mrb[0].mxu0
        %v768 = vadd.f32 %v613, %v767
        %v769 = vpop.f32.mrb[0].mxu0
        %v770 = vadd.f32 %v609, %v769
        %v771 = vpop.f32.mrb[0].mxu0
        %v772 = vadd.f32 %v613, %v771
        %773 = vmatprep.mubr.bf16.mxu0 0
        %774 = vmatmul.mubr.bf16.gmra.mrb[0].mxu0 %v690
        %v775 = vpop.f32.mrb[0].mxu0
        %v776 = vadd.f32 %v609, %v775
        %v777 = vpop.f32.mrb[0].mxu0
        %v778 = vadd.f32 %v613, %v777
        %v779 = vpop.f32.mrb[0].mxu0
        %v780 = vadd.f32 %v609, %v779
        %v781 = vpop.f32.mrb[0].mxu0
        %v782 = vadd.f32 %v613, %v781
        %783 = vmatprep.mubr.bf16.mxu0 0
        %784 = vmatmul.mubr.bf16.gmra.mrb[0].mxu0 %v693
        %v785 = vpop.f32.mrb[0].mxu0
        %v786 = vadd.f32 %v609, %v785
        %v787 = vpop.f32.mrb[0].mxu0
        %v788 = vadd.f32 %v613, %v787
        %v789 = vpop.f32.mrb[0].mxu0
        %v790 = vadd.f32 %v609, %v789
        %v791 = vpop.f32.mrb[0].mxu0
        %v792 = vadd.f32 %v613, %v791
        %793 = vmatprep.mubr.bf16.mxu0 0
        %794 = vmatmul.mubr.bf16.gmra.mrb[0].mxu0 %v696
        %v795 = vpop.f32.mrb[0].mxu0
        %v796 = vadd.f32 %v609, %v795
        %v797 = vpop.f32.mrb[0].mxu0
        %v798 = vadd.f32 %v613, %v797
        %v799 = vpop.f32.mrb[0].mxu0
        %v800 = vadd.f32 %v609, %v799
        %v801 = vpop.f32.mrb[0].mxu0
        %v802 = vadd.f32 %v613, %v801
        %803 = vmatprep.mubr.bf16.mxu0 0
        %804 = vmatmul.mubr.bf16.gmra.mrb[0].mxu0 %v699
        %v805 = vpop.f32.mrb[0].mxu0
        %v806 = vadd.f32 %v609, %v805
        %v807 = vpop.f32.mrb[0].mxu0
        %v808 = vadd.f32 %v613, %v807
        %v809 = vpop.f32.mrb[0].mxu0
        %v810 = vadd.f32 %v609, %v809
        %v811 = vpop.f32.mrb[0].mxu0
        %v812 = vadd.f32 %v613, %v811
        %813 = vdwg.mxu0
        %v814 = vpack.c.bf16 %v740, %v736
        %v815 = vpack.c.bf16 %v742, %v738
        %v816 = vpack.c.bf16 %v750, %v746
        %v817 = vpack.c.bf16 %v752, %v748
        %v818 = vpack.c.bf16 %v760, %v756
        %v819 = vpack.c.bf16 %v762, %v758
        %v820 = vpack.c.bf16 %v770, %v766
        %v821 = vpack.c.bf16 %v772, %v768
        %v822 = vpack.c.bf16 %v780, %v776
        %v823 = vpack.c.bf16 %v782, %v778
        %v824 = vpack.c.bf16 %v790, %v786
        %v825 = vpack.c.bf16 %v792, %v788
        %v826 = vpack.c.bf16 %v800, %v796
        %v827 = vpack.c.bf16 %v802, %v798
        %v828 = vpack.c.bf16 %v810, %v806
        %v829 = vpack.c.bf16 %v812, %v808
        %v830 = vld [vmem:[%s4] sm:$0xff]
        %v831 = vld [vmem:[%s4 + $0x8] sm:$0xff]
        %v832 = vld [vmem:[%s4 + $0x10] sm:$0xff]
        %v833 = vld [vmem:[%s4 + $0x18] sm:$0xff]
        %v834 = vld [vmem:[%s4 + $0x20] sm:$0xff]
        %v835 = vld [vmem:[%s4 + $0x28] sm:$0xff]
        %v836 = vld [vmem:[%s4 + $0x30] sm:$0xff]
        %v837 = vld [vmem:[%s4 + $0x38] sm:$0xff]
        %v838 = vld [vmem:[%s4 + $0x40] sm:$0xff]
        %v839 = vld [vmem:[%s4 + $0x48] sm:$0xff]
        %v840 = vld [vmem:[%s4 + $0x50] sm:$0xff]
        %v841 = vld [vmem:[%s4 + $0x58] sm:$0xff]
        %v842 = vld [vmem:[%s4 + $0x60] sm:$0xff]
        %v843 = vld [vmem:[%s4 + $0x68] sm:$0xff]
        %v844 = vld [vmem:[%s4 + $0x70] sm:$0xff]
        %v845 = vld [vmem:[%s4 + $0x78] sm:$0xff]
        %v846 = vld [vmem:[%s4 + $0x80] sm:$0xff]
        %v847 = vld [vmem:[%s4 + $0x88] sm:$0xff]
        %v848 = vld [vmem:[%s4 + $0x90] sm:$0xff]
        %v849 = vld [vmem:[%s4 + $0x98] sm:$0xff]
        %v850 = vld [vmem:[%s4 + $0xa0] sm:$0xff]
        %v851 = vld [vmem:[%s4 + $0xa8] sm:$0xff]
        %v852 = vld [vmem:[%s4 + $0xb0] sm:$0xff]
        %v853 = vld [vmem:[%s4 + $0xb8] sm:$0xff]
        %v854 = vld [vmem:[%s4 + $0xc0] sm:$0xff]
        %v855 = vld [vmem:[%s4 + $0xc8] sm:$0xff]
        %v856 = vld [vmem:[%s4 + $0xd0] sm:$0xff]
        %v857 = vld [vmem:[%s4 + $0xd8] sm:$0xff]
        %v858 = vld [vmem:[%s4 + $0xe0] sm:$0xff]
        %v859 = vld [vmem:[%s4 + $0xe8] sm:$0xff]
        %v860 = vld [vmem:[%s4 + $0xf0] sm:$0xff]
        %v861 = vld [vmem:[%s4 + $0xf8] sm:$0xff]
        %v862 = vld [vmem:[%s5] sm:$0x3]
        %v864 = vlaneseq
        %v865 = vshrl.u32 %v864, 7
        %v866 = vsub.s32 0, %v865
        %v867 = vrot.slane %v862, %v866
        %v868 = vlaneseq
        %v869 = vshrl.u32 %v868, 7
        %v870 = vsub.s32 1, %v869
        %v871 = vrot.slane %v862, %v870
        %v906 = vunpack.c.l.b16 %v830
        %v907 = vunpack.c.h.b16 %v830
        %v908 = vunpack.c.l.b16 %v831
        %v909 = vunpack.c.h.b16 %v831
        %v910 = vunpack.c.l.b16 %v832
        %v911 = vunpack.c.h.b16 %v832
        %v912 = vunpack.c.l.b16 %v833
        %v913 = vunpack.c.h.b16 %v833
        %v914 = vunpack.c.l.b16 %v834
        %v915 = vunpack.c.h.b16 %v834
        %v916 = vunpack.c.l.b16 %v835
        %v917 = vunpack.c.h.b16 %v835
        %v918 = vunpack.c.l.b16 %v836
        %v919 = vunpack.c.h.b16 %v836
        %v920 = vunpack.c.l.b16 %v837
        %v921 = vunpack.c.h.b16 %v837
        %v922 = vunpack.c.l.b16 %v838
        %v923 = vunpack.c.h.b16 %v838
        %v924 = vunpack.c.l.b16 %v839
        %v925 = vunpack.c.h.b16 %v839
        %v926 = vunpack.c.l.b16 %v840
        %v927 = vunpack.c.h.b16 %v840
        %v928 = vunpack.c.l.b16 %v841
        %v929 = vunpack.c.h.b16 %v841
        %v930 = vunpack.c.l.b16 %v842
        %v931 = vunpack.c.h.b16 %v842
        %v932 = vunpack.c.l.b16 %v843
        %v933 = vunpack.c.h.b16 %v843
        %v934 = vunpack.c.l.b16 %v844
        %v935 = vunpack.c.h.b16 %v844
        %v936 = vunpack.c.l.b16 %v845
        %v937 = vunpack.c.h.b16 %v845
        %v938 = vunpack.c.l.b16 %v846
        %v939 = vunpack.c.h.b16 %v846
        %v940 = vunpack.c.l.b16 %v847
        %v941 = vunpack.c.h.b16 %v847
        %v942 = vunpack.c.l.b16 %v848
        %v943 = vunpack.c.h.b16 %v848
        %v944 = vunpack.c.l.b16 %v849
        %v945 = vunpack.c.h.b16 %v849
        %v946 = vunpack.c.l.b16 %v850
        %v947 = vunpack.c.h.b16 %v850
        %v948 = vunpack.c.l.b16 %v851
        %v949 = vunpack.c.h.b16 %v851
        %v950 = vunpack.c.l.b16 %v852
        %v951 = vunpack.c.h.b16 %v852
        %v952 = vunpack.c.l.b16 %v853
        %v953 = vunpack.c.h.b16 %v853
        %v954 = vunpack.c.l.b16 %v854
        %v955 = vunpack.c.h.b16 %v854
        %v956 = vunpack.c.l.b16 %v855
        %v957 = vunpack.c.h.b16 %v855
        %v958 = vunpack.c.l.b16 %v856
        %v959 = vunpack.c.h.b16 %v856
        %v960 = vunpack.c.l.b16 %v857
        %v961 = vunpack.c.h.b16 %v857
        %v962 = vunpack.c.l.b16 %v858
        %v963 = vunpack.c.h.b16 %v858
        %v964 = vunpack.c.l.b16 %v859
        %v965 = vunpack.c.h.b16 %v859
        %v966 = vunpack.c.l.b16 %v860
        %v967 = vunpack.c.h.b16 %v860
        %v968 = vunpack.c.l.b16 %v861
        %v969 = vunpack.c.h.b16 %v861
        %v970 = vpack.c.b16 %v908, %v906
        %v971 = vpack.c.b16 %v909, %v907
        %v972 = vpack.c.b16 %v912, %v910
        %v973 = vpack.c.b16 %v913, %v911
        %v974 = vpack.c.b16 %v916, %v914
        %v975 = vpack.c.b16 %v917, %v915
        %v976 = vpack.c.b16 %v920, %v918
        %v977 = vpack.c.b16 %v921, %v919
        %v978 = vpack.c.b16 %v924, %v922
        %v979 = vpack.c.b16 %v925, %v923
        %v980 = vpack.c.b16 %v928, %v926
        %v981 = vpack.c.b16 %v929, %v927
        %v982 = vpack.c.b16 %v932, %v930
        %v983 = vpack.c.b16 %v933, %v931
        %v984 = vpack.c.b16 %v936, %v934
        %v985 = vpack.c.b16 %v937, %v935
        %v986 = vpack.c.b16 %v940, %v938
        %v987 = vpack.c.b16 %v941, %v939
        %v988 = vpack.c.b16 %v944, %v942
        %v989 = vpack.c.b16 %v945, %v943
        %v990 = vpack.c.b16 %v948, %v946
        %v991 = vpack.c.b16 %v949, %v947
        %v992 = vpack.c.b16 %v952, %v950
        %v993 = vpack.c.b16 %v953, %v951
        %v994 = vpack.c.b16 %v956, %v954
        %v995 = vpack.c.b16 %v957, %v955
        %v996 = vpack.c.b16 %v960, %v958
        %v997 = vpack.c.b16 %v961, %v959
        %v998 = vpack.c.b16 %v964, %v962
        %v999 = vpack.c.b16 %v965, %v963
        %v1000 = vpack.c.b16 %v968, %v966
        %v1001 = vpack.c.b16 %v969, %v967
        %1034 = vmatprep.subr.bf16.mxu0 %v971
        %1035 = vmatpush1.bf16.msra.mxu0 %v970
        %1036 = vmatprep.subr.bf16.mxu0 %v973
        %1037 = vmatpush1.bf16.msra.mxu0 %v972
        %1038 = vmatprep.subr.bf16.mxu0 %v975
        %1039 = vmatpush1.bf16.msra.mxu0 %v974
        %1040 = vmatprep.subr.bf16.mxu0 %v977
        %1041 = vmatpush1.bf16.msra.mxu0 %v976
        %1042 = vmatprep.subr.bf16.mxu0 %v979
        %1043 = vmatpush1.bf16.msra.mxu0 %v978
        %1044 = vmatprep.subr.bf16.mxu0 %v981
        %1045 = vmatpush1.bf16.msra.mxu0 %v980
        %1046 = vmatprep.subr.bf16.mxu0 %v983
        %1047 = vmatpush1.bf16.msra.mxu0 %v982
        %1048 = vmatprep.subr.bf16.mxu0 %v985
        %1049 = vmatpush1.bf16.msra.mxu0 %v984
        %1050 = vmatprep.subr.bf16.mxu0 %v987
        %1051 = vmatpush1.bf16.msra.mxu0 %v986
        %1052 = vmatprep.subr.bf16.mxu0 %v989
        %1053 = vmatpush1.bf16.msra.mxu0 %v988
        %1054 = vmatprep.subr.bf16.mxu0 %v991
        %1055 = vmatpush1.bf16.msra.mxu0 %v990
        %1056 = vmatprep.subr.bf16.mxu0 %v993
        %1057 = vmatpush1.bf16.msra.mxu0 %v992
        %1058 = vmatprep.subr.bf16.mxu0 %v995
        %1059 = vmatpush1.bf16.msra.mxu0 %v994
        %1060 = vmatprep.subr.bf16.mxu0 %v997
        %1061 = vmatpush1.bf16.msra.mxu0 %v996
        %1062 = vmatprep.subr.bf16.mxu0 %v999
        %1063 = vmatpush1.bf16.msra.mxu0 %v998
        %1064 = vmatprep.subr.bf16.mxu0 %v1001
        %1065 = vmatpush1.bf16.msra.mxu0 %v1000
        %1066 = vmatprep.mubr.bf16.mxu0 %v815
        %1067 = vmatmul.mubr.bf16.gmra.mrb[0].mxu0 %v814
        %v1068 = vpop.f32.mrb[0].mxu0
        %v1069 = vadd.f32 %v867, %v1068
        %v1070 = vpop.f32.mrb[0].mxu0
        %v1071 = vadd.f32 %v871, %v1070
        %v1072 = vpop.f32.mrb[0].mxu0
        %v1073 = vadd.f32 %v867, %v1072
        %v1074 = vpop.f32.mrb[0].mxu0
        %v1075 = vadd.f32 %v871, %v1074
        %1076 = vmatprep.mubr.bf16.mxu0 %v817
        %1077 = vmatmul.mubr.bf16.gmra.mrb[0].mxu0 %v816
        %v1078 = vpop.f32.mrb[0].mxu0
        %v1079 = vadd.f32 %v867, %v1078
        %v1080 = vpop.f32.mrb[0].mxu0
        %v1081 = vadd.f32 %v871, %v1080
        %v1082 = vpop.f32.mrb[0].mxu0
        %v1083 = vadd.f32 %v867, %v1082
        %v1084 = vpop.f32.mrb[0].mxu0
        %v1085 = vadd.f32 %v871, %v1084
        %1086 = vmatprep.mubr.bf16.mxu0 %v819
        %1087 = vmatmul.mubr.bf16.gmra.mrb[0].mxu0 %v818
        %v1088 = vpop.f32.mrb[0].mxu0
        %v1089 = vadd.f32 %v867, %v1088
        %v1090 = vpop.f32.mrb[0].mxu0
        %v1091 = vadd.f32 %v871, %v1090
        %v1092 = vpop.f32.mrb[0].mxu0
        %v1093 = vadd.f32 %v867, %v1092
        %v1094 = vpop.f32.mrb[0].mxu0
        %v1095 = vadd.f32 %v871, %v1094
        %1096 = vmatprep.mubr.bf16.mxu0 %v821
        %1097 = vmatmul.mubr.bf16.gmra.mrb[0].mxu0 %v820
        %v1098 = vpop.f32.mrb[0].mxu0
        %v1099 = vadd.f32 %v867, %v1098
        %v1100 = vpop.f32.mrb[0].mxu0
        %v1101 = vadd.f32 %v871, %v1100
        %v1102 = vpop.f32.mrb[0].mxu0
        %v1103 = vadd.f32 %v867, %v1102
        %v1104 = vpop.f32.mrb[0].mxu0
        %v1105 = vadd.f32 %v871, %v1104
        %1106 = vmatprep.mubr.bf16.mxu0 %v823
        %1107 = vmatmul.mubr.bf16.gmra.mrb[0].mxu0 %v822
        %v1108 = vpop.f32.mrb[0].mxu0
        %v1109 = vadd.f32 %v867, %v1108
        %v1110 = vpop.f32.mrb[0].mxu0
        %v1111 = vadd.f32 %v871, %v1110
        %v1112 = vpop.f32.mrb[0].mxu0
        %v1113 = vadd.f32 %v867, %v1112
        %v1114 = vpop.f32.mrb[0].mxu0
        %v1115 = vadd.f32 %v871, %v1114
        %1116 = vmatprep.mubr.bf16.mxu0 %v825
        %1117 = vmatmul.mubr.bf16.gmra.mrb[0].mxu0 %v824
        %v1118 = vpop.f32.mrb[0].mxu0
        %v1119 = vadd.f32 %v867, %v1118
        %v1120 = vpop.f32.mrb[0].mxu0
        %v1121 = vadd.f32 %v871, %v1120
        %v1122 = vpop.f32.mrb[0].mxu0
        %v1123 = vadd.f32 %v867, %v1122
        %v1124 = vpop.f32.mrb[0].mxu0
        %v1125 = vadd.f32 %v871, %v1124
        %1126 = vmatprep.mubr.bf16.mxu0 %v827
        %1127 = vmatmul.mubr.bf16.gmra.mrb[0].mxu0 %v826
        %v1128 = vpop.f32.mrb[0].mxu0
        %v1129 = vadd.f32 %v867, %v1128
        %v1130 = vpop.f32.mrb[0].mxu0
        %v1131 = vadd.f32 %v871, %v1130
        %v1132 = vpop.f32.mrb[0].mxu0
        %v1133 = vadd.f32 %v867, %v1132
        %v1134 = vpop.f32.mrb[0].mxu0
        %v1135 = vadd.f32 %v871, %v1134
        %1136 = vmatprep.mubr.bf16.mxu0 %v829
        %1137 = vmatmul.mubr.bf16.gmra.mrb[0].mxu0 %v828
        %v1138 = vpop.f32.mrb[0].mxu0
        %v1139 = vadd.f32 %v867, %v1138
        %v1140 = vpop.f32.mrb[0].mxu0
        %v1141 = vadd.f32 %v871, %v1140
        %v1142 = vpop.f32.mrb[0].mxu0
        %v1143 = vadd.f32 %v867, %v1142
        %v1144 = vpop.f32.mrb[0].mxu0
        %v1145 = vadd.f32 %v871, %v1144
        %1146 = vdwg.mxu0
        %v1147 = vmax.f32 %v1069, 0.0
        %v1148 = vmax.f32 %v1071, 0.0
        %v1149 = vmax.f32 %v1073, 0.0
        %v1150 = vmax.f32 %v1075, 0.0
        %v1151 = vmax.f32 %v1079, 0.0
        %v1152 = vmax.f32 %v1081, 0.0
        %v1153 = vmax.f32 %v1083, 0.0
        %v1154 = vmax.f32 %v1085, 0.0
        %v1155 = vmax.f32 %v1089, 0.0
        %v1156 = vmax.f32 %v1091, 0.0
        %v1157 = vmax.f32 %v1093, 0.0
        %v1158 = vmax.f32 %v1095, 0.0
        %v1159 = vmax.f32 %v1099, 0.0
        %v1160 = vmax.f32 %v1101, 0.0
        %v1161 = vmax.f32 %v1103, 0.0
        %v1162 = vmax.f32 %v1105, 0.0
        %v1163 = vmax.f32 %v1109, 0.0
        %v1164 = vmax.f32 %v1111, 0.0
        %v1165 = vmax.f32 %v1113, 0.0
        %v1166 = vmax.f32 %v1115, 0.0
        %v1167 = vmax.f32 %v1119, 0.0
        %v1168 = vmax.f32 %v1121, 0.0
        %v1169 = vmax.f32 %v1123, 0.0
        %v1170 = vmax.f32 %v1125, 0.0
        %v1171 = vmax.f32 %v1129, 0.0
        %v1172 = vmax.f32 %v1131, 0.0
        %v1173 = vmax.f32 %v1133, 0.0
        %v1174 = vmax.f32 %v1135, 0.0
        %v1175 = vmax.f32 %v1139, 0.0
        %v1176 = vmax.f32 %v1141, 0.0
        %v1177 = vmax.f32 %v1143, 0.0
        %v1178 = vmax.f32 %v1145, 0.0
        %v1179 = vld [vmem:[%s6] sm:$0x1]
        %v1181 = vlaneseq
        %v1182 = vshrl.u32 %v1181, 7
        %v1183 = vsub.s32 0, %v1182
        %v1184 = vrot.slane %v1179, %v1183
        %v1186 = vmul.f32 %v1148, %v1184
        %v1187 = vmul.f32 %v1150, %v1184
        %v1188 = vmul.f32 %v1152, %v1184
        %v1189 = vmul.f32 %v1154, %v1184
        %v1190 = vmul.f32 %v1156, %v1184
        %v1191 = vmul.f32 %v1158, %v1184
        %v1192 = vmul.f32 %v1160, %v1184
        %v1193 = vmul.f32 %v1162, %v1184
        %v1194 = vmul.f32 %v1164, %v1184
        %v1195 = vmul.f32 %v1166, %v1184
        %v1196 = vmul.f32 %v1168, %v1184
        %v1197 = vmul.f32 %v1170, %v1184
        %v1198 = vmul.f32 %v1172, %v1184
        %v1199 = vmul.f32 %v1174, %v1184
        %v1200 = vmul.f32 %v1176, %v1184
        %v1201 = vmul.f32 %v1178, %v1184
        %vm1202 = vcmask 523264
        %v1203 = vsel %vm1202, %v1186, 0.0
        %1204 = vadd.xlane.f32.xlu0 %v1203
        %v1205 = vpop.xlane.xlu0 %1204
        %v1206 = vsel %vm1202, %v1187, 0.0
        %1207 = vadd.xlane.f32.xlu0 %v1206
        %v1208 = vpop.xlane.xlu0 %1207
        %v1209 = vsel %vm1202, %v1188, 0.0
        %1210 = vadd.xlane.f32.xlu0 %v1209
        %v1211 = vpop.xlane.xlu0 %1210
        %v1212 = vsel %vm1202, %v1189, 0.0
        %1213 = vadd.xlane.f32.xlu0 %v1212
        %v1214 = vpop.xlane.xlu0 %1213
        %v1215 = vsel %vm1202, %v1190, 0.0
        %1216 = vadd.xlane.f32.xlu0 %v1215
        %v1217 = vpop.xlane.xlu0 %1216
        %v1218 = vsel %vm1202, %v1191, 0.0
        %1219 = vadd.xlane.f32.xlu0 %v1218
        %v1220 = vpop.xlane.xlu0 %1219
        %v1221 = vsel %vm1202, %v1192, 0.0
        %1222 = vadd.xlane.f32.xlu0 %v1221
        %v1223 = vpop.xlane.xlu0 %1222
        %v1224 = vsel %vm1202, %v1193, 0.0
        %1225 = vadd.xlane.f32.xlu0 %v1224
        %v1226 = vpop.xlane.xlu0 %1225
        %v1227 = vsel %vm1202, %v1194, 0.0
        %1228 = vadd.xlane.f32.xlu0 %v1227
        %v1229 = vpop.xlane.xlu0 %1228
        %v1230 = vsel %vm1202, %v1195, 0.0
        %1231 = vadd.xlane.f32.xlu0 %v1230
        %v1232 = vpop.xlane.xlu0 %1231
        %v1233 = vsel %vm1202, %v1196, 0.0
        %1234 = vadd.xlane.f32.xlu0 %v1233
        %v1235 = vpop.xlane.xlu0 %1234
        %v1236 = vsel %vm1202, %v1197, 0.0
        %1237 = vadd.xlane.f32.xlu0 %v1236
        %v1238 = vpop.xlane.xlu0 %1237
        %v1239 = vsel %vm1202, %v1198, 0.0
        %1240 = vadd.xlane.f32.xlu0 %v1239
        %v1241 = vpop.xlane.xlu0 %1240
        %v1242 = vsel %vm1202, %v1199, 0.0
        %1243 = vadd.xlane.f32.xlu0 %v1242
        %v1244 = vpop.xlane.xlu0 %1243
        %v1245 = vsel %vm1202, %v1200, 0.0
        %1246 = vadd.xlane.f32.xlu0 %v1245
        %v1247 = vpop.xlane.xlu0 %1246
        %v1248 = vsel %vm1202, %v1201, 0.0
        %1249 = vadd.xlane.f32.xlu0 %v1248
        %v1250 = vpop.xlane.xlu0 %1249
        %v1251 = vld [vmem:[%s567] sm:$0xff]
        %v1252 = vld [vmem:[%s567 + $0x8] sm:$0xff]
        %v1253 = vld [vmem:[%s567 + $0x10] sm:$0xff]
        %v1254 = vld [vmem:[%s567 + $0x18] sm:$0xff]
        %v1255 = vld [vmem:[%s567 + $0x20] sm:$0xff]
        %v1256 = vld [vmem:[%s567 + $0x28] sm:$0xff]
        %v1257 = vld [vmem:[%s567 + $0x30] sm:$0xff]
        %v1258 = vld [vmem:[%s567 + $0x38] sm:$0xff]
        %v1259 = vld [vmem:[%s567 + $0x40] sm:$0xff]
        %v1260 = vld [vmem:[%s567 + $0x48] sm:$0xff]
        %v1261 = vld [vmem:[%s567 + $0x50] sm:$0xff]
        %v1262 = vld [vmem:[%s567 + $0x58] sm:$0xff]
        %v1263 = vld [vmem:[%s567 + $0x60] sm:$0xff]
        %v1264 = vld [vmem:[%s567 + $0x68] sm:$0xff]
        %v1265 = vld [vmem:[%s567 + $0x70] sm:$0xff]
        %v1266 = vld [vmem:[%s567 + $0x78] sm:$0xff]
        %v1267 = vadd.f32 %v1205, %v1251
        %v1268 = vadd.f32 %v1208, %v1252
        %v1269 = vadd.f32 %v1211, %v1253
        %v1270 = vadd.f32 %v1214, %v1254
        %v1271 = vadd.f32 %v1217, %v1255
        %v1272 = vadd.f32 %v1220, %v1256
        %v1273 = vadd.f32 %v1223, %v1257
        %v1274 = vadd.f32 %v1226, %v1258
        %v1275 = vadd.f32 %v1229, %v1259
        %v1276 = vadd.f32 %v1232, %v1260
        %v1277 = vadd.f32 %v1235, %v1261
        %v1278 = vadd.f32 %v1238, %v1262
        %v1279 = vadd.f32 %v1241, %v1263
        %v1280 = vadd.f32 %v1244, %v1264
        %v1281 = vadd.f32 %v1247, %v1265
        %v1282 = vadd.f32 %v1250, %v1266
        %vm1283 = vcmp.ge.f32.partialorder %v1267, 0.0
        %vm1284 = vcmp.ge.f32.partialorder %v1268, 0.0
        %vm1285 = vcmp.ge.f32.partialorder %v1269, 0.0
        %vm1286 = vcmp.ge.f32.partialorder %v1270, 0.0
        %vm1287 = vcmp.ge.f32.partialorder %v1271, 0.0
        %vm1288 = vcmp.ge.f32.partialorder %v1272, 0.0
        %vm1289 = vcmp.ge.f32.partialorder %v1273, 0.0
        %vm1290 = vcmp.ge.f32.partialorder %v1274, 0.0
        %vm1291 = vcmp.ge.f32.partialorder %v1275, 0.0
        %vm1292 = vcmp.ge.f32.partialorder %v1276, 0.0
        %vm1293 = vcmp.ge.f32.partialorder %v1277, 0.0
        %vm1294 = vcmp.ge.f32.partialorder %v1278, 0.0
        %vm1295 = vcmp.ge.f32.partialorder %v1279, 0.0
        %vm1296 = vcmp.ge.f32.partialorder %v1280, 0.0
        %vm1297 = vcmp.ge.f32.partialorder %v1281, 0.0
        %vm1298 = vcmp.ge.f32.partialorder %v1282, 0.0
        %v1299 = vsel %vm1283, 1, 0
        %v1300 = vsel %vm1284, 1, 0
        %v1301 = vsel %vm1285, 1, 0
        %v1302 = vsel %vm1286, 1, 0
        %v1303 = vsel %vm1287, 1, 0
        %v1304 = vsel %vm1288, 1, 0
        %v1305 = vsel %vm1289, 1, 0
        %v1306 = vsel %vm1290, 1, 0
        %v1307 = vsel %vm1291, 1, 0
        %v1308 = vsel %vm1292, 1, 0
        %v1309 = vsel %vm1293, 1, 0
        %v1310 = vsel %vm1294, 1, 0
        %v1311 = vsel %vm1295, 1, 0
        %v1312 = vsel %vm1296, 1, 0
        %v1313 = vsel %vm1297, 1, 0
        %v1314 = vsel %vm1298, 1, 0
        %v1315 = vcvt.s32.f32 %v1299
        %v1316 = vcvt.s32.f32 %v1300
        %v1317 = vcvt.s32.f32 %v1301
        %v1318 = vcvt.s32.f32 %v1302
        %v1319 = vcvt.s32.f32 %v1303
        %v1320 = vcvt.s32.f32 %v1304
        %v1321 = vcvt.s32.f32 %v1305
        %v1322 = vcvt.s32.f32 %v1306
        %v1323 = vcvt.s32.f32 %v1307
        %v1324 = vcvt.s32.f32 %v1308
        %v1325 = vcvt.s32.f32 %v1309
        %v1326 = vcvt.s32.f32 %v1310
        %v1327 = vcvt.s32.f32 %v1311
        %v1328 = vcvt.s32.f32 %v1312
        %v1329 = vcvt.s32.f32 %v1313
        %v1330 = vcvt.s32.f32 %v1314
        %1332 = vset.pattern.permute.xlu0 0
        %1333 = vperm.xlu0 %1332, %v1315
        %v1334 = vpop.permute.xlu0 %1333
        %1337 = vset.pattern.permute.xlu0 0
        %1338 = vperm.xlu0 %1337, %v1316
        %v1339 = vpop.permute.xlu0 %1338
        %1342 = vset.pattern.permute.xlu0 0
        %1343 = vperm.xlu0 %1342, %v1317
        %v1344 = vpop.permute.xlu0 %1343
        %1347 = vset.pattern.permute.xlu0 0
        %1348 = vperm.xlu0 %1347, %v1318
        %v1349 = vpop.permute.xlu0 %1348
        %1352 = vset.pattern.permute.xlu0 0
        %1353 = vperm.xlu0 %1352, %v1319
        %v1354 = vpop.permute.xlu0 %1353
        %1357 = vset.pattern.permute.xlu0 0
        %1358 = vperm.xlu0 %1357, %v1320
        %v1359 = vpop.permute.xlu0 %1358
        %1362 = vset.pattern.permute.xlu0 0
        %1363 = vperm.xlu0 %1362, %v1321
        %v1364 = vpop.permute.xlu0 %1363
        %1367 = vset.pattern.permute.xlu0 0
        %1368 = vperm.xlu0 %1367, %v1322
        %v1369 = vpop.permute.xlu0 %1368
        %1372 = vset.pattern.permute.xlu0 0
        %1373 = vperm.xlu0 %1372, %v1323
        %v1374 = vpop.permute.xlu0 %1373
        %1377 = vset.pattern.permute.xlu0 0
        %1378 = vperm.xlu0 %1377, %v1324
        %v1379 = vpop.permute.xlu0 %1378
        %1382 = vset.pattern.permute.xlu0 0
        %1383 = vperm.xlu0 %1382, %v1325
        %v1384 = vpop.permute.xlu0 %1383
        %1387 = vset.pattern.permute.xlu0 0
        %1388 = vperm.xlu0 %1387, %v1326
        %v1389 = vpop.permute.xlu0 %1388
        %1392 = vset.pattern.permute.xlu0 0
        %1393 = vperm.xlu0 %1392, %v1327
        %v1394 = vpop.permute.xlu0 %1393
        %1397 = vset.pattern.permute.xlu0 0
        %1398 = vperm.xlu0 %1397, %v1328
        %v1399 = vpop.permute.xlu0 %1398
        %1402 = vset.pattern.permute.xlu0 0
        %1403 = vperm.xlu0 %1402, %v1329
        %v1404 = vpop.permute.xlu0 %1403
        %1407 = vset.pattern.permute.xlu0 0
        %1408 = vperm.xlu0 %1407, %v1330
        %v1409 = vpop.permute.xlu0 %1408
        %v1411 = vmul.f32 %v1148, %v1334
        %v1412 = vmul.f32 %v1150, %v1339
        %v1413 = vmul.f32 %v1152, %v1344
        %v1414 = vmul.f32 %v1154, %v1349
        %v1415 = vmul.f32 %v1156, %v1354
        %v1416 = vmul.f32 %v1158, %v1359
        %v1417 = vmul.f32 %v1160, %v1364
        %v1418 = vmul.f32 %v1162, %v1369
        %v1419 = vmul.f32 %v1164, %v1374
        %v1420 = vmul.f32 %v1166, %v1379
        %v1421 = vmul.f32 %v1168, %v1384
        %v1422 = vmul.f32 %v1170, %v1389
        %v1423 = vmul.f32 %v1172, %v1394
        %v1424 = vmul.f32 %v1174, %v1399
        %v1425 = vmul.f32 %v1176, %v1404
        %v1426 = vmul.f32 %v1178, %v1409
        %v1427 = vpack.c.bf16 %v1412, %v1411
        %v1428 = vpack.c.bf16 %v1414, %v1413
        %v1429 = vpack.c.bf16 %v1416, %v1415
        %v1430 = vpack.c.bf16 %v1418, %v1417
        %v1431 = vpack.c.bf16 %v1420, %v1419
        %v1432 = vpack.c.bf16 %v1422, %v1421
        %v1433 = vpack.c.bf16 %v1424, %v1423
        %v1434 = vpack.c.bf16 %v1426, %v1425
        %v1435 = vld [vmem:[%s7] sm:$0xff]
        %v1436 = vld [vmem:[%s7 + $0x8] sm:$0xff]
        %v1437 = vld [vmem:[%s7 + $0x10] sm:$0xff]
        %v1438 = vld [vmem:[%s7 + $0x18] sm:$0xff]
        %v1439 = vld [vmem:[%s7 + $0x20] sm:$0xff]
        %v1440 = vld [vmem:[%s7 + $0x28] sm:$0xff]
        %v1441 = vld [vmem:[%s7 + $0x30] sm:$0xff]
        %v1442 = vld [vmem:[%s7 + $0x38] sm:$0xff]
        %v1443 = vld [vmem:[%s8] sm:$0x3]
        %v1445 = vlaneseq
        %v1446 = vshrl.u32 %v1445, 7
        %v1447 = vsub.s32 0, %v1446
        %v1448 = vrot.slane %v1443, %v1447
        %v1449 = vlaneseq
        %v1450 = vshrl.u32 %v1449, 7
        %v1451 = vsub.s32 1, %v1450
        %v1452 = vrot.slane %v1443, %v1451
        %v1463 = vunpack.c.l.b16 %v1435
        %v1464 = vunpack.c.h.b16 %v1435
        %v1465 = vunpack.c.l.b16 %v1436
        %v1466 = vunpack.c.h.b16 %v1436
        %v1467 = vunpack.c.l.b16 %v1437
        %v1468 = vunpack.c.h.b16 %v1437
        %v1469 = vunpack.c.l.b16 %v1438
        %v1470 = vunpack.c.h.b16 %v1438
        %v1471 = vunpack.c.l.b16 %v1439
        %v1472 = vunpack.c.h.b16 %v1439
        %v1473 = vunpack.c.l.b16 %v1440
        %v1474 = vunpack.c.h.b16 %v1440
        %v1475 = vunpack.c.l.b16 %v1441
        %v1476 = vunpack.c.h.b16 %v1441
        %v1477 = vunpack.c.l.b16 %v1442
        %v1478 = vunpack.c.h.b16 %v1442
        %v1479 = vpack.c.b16 %v1465, %v1463
        %v1480 = vpack.c.b16 %v1466, %v1464
        %v1481 = vpack.c.b16 %v1469, %v1467
        %v1482 = vpack.c.b16 %v1470, %v1468
        %v1483 = vpack.c.b16 %v1473, %v1471
        %v1484 = vpack.c.b16 %v1474, %v1472
        %v1485 = vpack.c.b16 %v1477, %v1475
        %v1486 = vpack.c.b16 %v1478, %v1476
        %v1496 = vsel %vm1202, %v1427, 0
        %v1499 = vsel %vm1202, %v1428, 0
        %v1502 = vsel %vm1202, %v1429, 0
        %v1505 = vsel %vm1202, %v1430, 0
        %v1508 = vsel %vm1202, %v1431, 0
        %v1511 = vsel %vm1202, %v1432, 0
        %v1514 = vsel %vm1202, %v1433, 0
        %v1517 = vsel %vm1202, %v1434, 0
        %1519 = vmatprep.subr.bf16.mxu0 %v1480
        %1520 = vmatpush1.bf16.msra.mxu0 %v1479
        %1521 = vmatprep.subr.bf16.mxu0 %v1482
        %1522 = vmatpush1.bf16.msra.mxu0 %v1481
        %1523 = vmatprep.subr.bf16.mxu0 %v1484
        %1524 = vmatpush1.bf16.msra.mxu0 %v1483
        %1525 = vmatprep.subr.bf16.mxu0 %v1486
        %1526 = vmatpush1.bf16.msra.mxu0 %v1485
        %1527 = vmatprep.subr.bf16.mxu0 0
        %1528 = vmatpush1.bf16.msra.mxu0 0
        %1529 = vmatprep.subr.bf16.mxu0 0
        %1530 = vmatpush1.bf16.msra.mxu0 0
        %1531 = vmatprep.subr.bf16.mxu0 0
        %1532 = vmatpush1.bf16.msra.mxu0 0
        %1533 = vmatprep.subr.bf16.mxu0 0
        %1534 = vmatpush1.bf16.msra.mxu0 0
        %1535 = vmatprep.subr.bf16.mxu0 0
        %1536 = vmatpush1.bf16.msra.mxu0 0
        %1537 = vmatprep.subr.bf16.mxu0 0
        %1538 = vmatpush1.bf16.msra.mxu0 0
        %1539 = vmatprep.subr.bf16.mxu0 0
        %1540 = vmatpush1.bf16.msra.mxu0 0
        %1541 = vmatprep.subr.bf16.mxu0 0
        %1542 = vmatpush1.bf16.msra.mxu0 0
        %1543 = vmatprep.subr.bf16.mxu0 0
        %1544 = vmatpush1.bf16.msra.mxu0 0
        %1545 = vmatprep.subr.bf16.mxu0 0
        %1546 = vmatpush1.bf16.msra.mxu0 0
        %1547 = vmatprep.subr.bf16.mxu0 0
        %1548 = vmatpush1.bf16.msra.mxu0 0
        %1549 = vmatprep.subr.bf16.mxu0 0
        %1550 = vmatpush1.bf16.msra.mxu0 0
        %1551 = vmatprep.mubr.bf16.mxu0 0
        %1552 = vmatmul.mubr.bf16.gmra.mrb[0].mxu0 %v1496
        %v1553 = vpop.f32.mrb[0].mxu0
        %v1554 = vadd.f32 %v1448, %v1553
        %v1555 = vpop.f32.mrb[0].mxu0
        %v1556 = vadd.f32 %v1452, %v1555
        %v1557 = vpop.f32.mrb[0].mxu0
        %v1558 = vadd.f32 %v1448, %v1557
        %v1559 = vpop.f32.mrb[0].mxu0
        %v1560 = vadd.f32 %v1452, %v1559
        %1561 = vmatprep.mubr.bf16.mxu0 0
        %1562 = vmatmul.mubr.bf16.gmra.mrb[0].mxu0 %v1499
        %v1563 = vpop.f32.mrb[0].mxu0
        %v1564 = vadd.f32 %v1448, %v1563
        %v1565 = vpop.f32.mrb[0].mxu0
        %v1566 = vadd.f32 %v1452, %v1565
        %v1567 = vpop.f32.mrb[0].mxu0
        %v1568 = vadd.f32 %v1448, %v1567
        %v1569 = vpop.f32.mrb[0].mxu0
        %v1570 = vadd.f32 %v1452, %v1569
        %1571 = vmatprep.mubr.bf16.mxu0 0
        %1572 = vmatmul.mubr.bf16.gmra.mrb[0].mxu0 %v1502
        %v1573 = vpop.f32.mrb[0].mxu0
        %v1574 = vadd.f32 %v1448, %v1573
        %v1575 = vpop.f32.mrb[0].mxu0
        %v1576 = vadd.f32 %v1452, %v1575
        %v1577 = vpop.f32.mrb[0].mxu0
        %v1578 = vadd.f32 %v1448, %v1577
        %v1579 = vpop.f32.mrb[0].mxu0
        %v1580 = vadd.f32 %v1452, %v1579
        %1581 = vmatprep.mubr.bf16.mxu0 0
        %1582 = vmatmul.mubr.bf16.gmra.mrb[0].mxu0 %v1505
        %v1583 = vpop.f32.mrb[0].mxu0
        %v1584 = vadd.f32 %v1448, %v1583
        %v1585 = vpop.f32.mrb[0].mxu0
        %v1586 = vadd.f32 %v1452, %v1585
        %v1587 = vpop.f32.mrb[0].mxu0
        %v1588 = vadd.f32 %v1448, %v1587
        %v1589 = vpop.f32.mrb[0].mxu0
        %v1590 = vadd.f32 %v1452, %v1589
        %1591 = vmatprep.mubr.bf16.mxu0 0
        %1592 = vmatmul.mubr.bf16.gmra.mrb[0].mxu0 %v1508
        %v1593 = vpop.f32.mrb[0].mxu0
        %v1594 = vadd.f32 %v1448, %v1593
        %v1595 = vpop.f32.mrb[0].mxu0
        %v1596 = vadd.f32 %v1452, %v1595
        %v1597 = vpop.f32.mrb[0].mxu0
        %v1598 = vadd.f32 %v1448, %v1597
        %v1599 = vpop.f32.mrb[0].mxu0
        %v1600 = vadd.f32 %v1452, %v1599
        %1601 = vmatprep.mubr.bf16.mxu0 0
        %1602 = vmatmul.mubr.bf16.gmra.mrb[0].mxu0 %v1511
        %v1603 = vpop.f32.mrb[0].mxu0
        %v1604 = vadd.f32 %v1448, %v1603
        %v1605 = vpop.f32.mrb[0].mxu0
        %v1606 = vadd.f32 %v1452, %v1605
        %v1607 = vpop.f32.mrb[0].mxu0
        %v1608 = vadd.f32 %v1448, %v1607
        %v1609 = vpop.f32.mrb[0].mxu0
        %v1610 = vadd.f32 %v1452, %v1609
        %1611 = vmatprep.mubr.bf16.mxu0 0
        %1612 = vmatmul.mubr.bf16.gmra.mrb[0].mxu0 %v1514
        %v1613 = vpop.f32.mrb[0].mxu0
        %v1614 = vadd.f32 %v1448, %v1613
        %v1615 = vpop.f32.mrb[0].mxu0
        %v1616 = vadd.f32 %v1452, %v1615
        %v1617 = vpop.f32.mrb[0].mxu0
        %v1618 = vadd.f32 %v1448, %v1617
        %v1619 = vpop.f32.mrb[0].mxu0
        %v1620 = vadd.f32 %v1452, %v1619
        %1621 = vmatprep.mubr.bf16.mxu0 0
        %1622 = vmatmul.mubr.bf16.gmra.mrb[0].mxu0 %v1517
        %v1623 = vpop.f32.mrb[0].mxu0
        %v1624 = vadd.f32 %v1448, %v1623
        %v1625 = vpop.f32.mrb[0].mxu0
        %v1626 = vadd.f32 %v1452, %v1625
        %v1627 = vpop.f32.mrb[0].mxu0
        %v1628 = vadd.f32 %v1448, %v1627
        %v1629 = vpop.f32.mrb[0].mxu0
        %v1630 = vadd.f32 %v1452, %v1629
        %1631 = vdwg.mxu0
        %v1632 = vmax.f32 %v1554, 0.0
        %v1633 = vmax.f32 %v1556, 0.0
        %v1634 = vmax.f32 %v1558, 0.0
        %v1635 = vmax.f32 %v1560, 0.0
        %v1636 = vmax.f32 %v1564, 0.0
        %v1637 = vmax.f32 %v1566, 0.0
        %v1638 = vmax.f32 %v1568, 0.0
        %v1639 = vmax.f32 %v1570, 0.0
        %v1640 = vmax.f32 %v1574, 0.0
        %v1641 = vmax.f32 %v1576, 0.0
        %v1642 = vmax.f32 %v1578, 0.0
        %v1643 = vmax.f32 %v1580, 0.0
        %v1644 = vmax.f32 %v1584, 0.0
        %v1645 = vmax.f32 %v1586, 0.0
        %v1646 = vmax.f32 %v1588, 0.0
        %v1647 = vmax.f32 %v1590, 0.0
        %v1648 = vmax.f32 %v1594, 0.0
        %v1649 = vmax.f32 %v1596, 0.0
        %v1650 = vmax.f32 %v1598, 0.0
        %v1651 = vmax.f32 %v1600, 0.0
        %v1652 = vmax.f32 %v1604, 0.0
        %v1653 = vmax.f32 %v1606, 0.0
        %v1654 = vmax.f32 %v1608, 0.0
        %v1655 = vmax.f32 %v1610, 0.0
        %v1656 = vmax.f32 %v1614, 0.0
        %v1657 = vmax.f32 %v1616, 0.0
        %v1658 = vmax.f32 %v1618, 0.0
        %v1659 = vmax.f32 %v1620, 0.0
        %v1660 = vmax.f32 %v1624, 0.0
        %v1661 = vmax.f32 %v1626, 0.0
        %v1662 = vmax.f32 %v1628, 0.0
        %v1663 = vmax.f32 %v1630, 0.0
        %v1664 = vmul.f32 %v736, %v736
        %v1665 = vmul.f32 %v738, %v738
        %v1666 = vmul.f32 %v740, %v740
        %v1667 = vmul.f32 %v742, %v742
        %v1668 = vmul.f32 %v746, %v746
        %v1669 = vmul.f32 %v748, %v748
        %v1670 = vmul.f32 %v750, %v750
        %v1671 = vmul.f32 %v752, %v752
        %v1672 = vmul.f32 %v756, %v756
        %v1673 = vmul.f32 %v758, %v758
        %v1674 = vmul.f32 %v760, %v760
        %v1675 = vmul.f32 %v762, %v762
        %v1676 = vmul.f32 %v766, %v766
        %v1677 = vmul.f32 %v768, %v768
        %v1678 = vmul.f32 %v770, %v770
        %v1679 = vmul.f32 %v772, %v772
        %v1680 = vmul.f32 %v776, %v776
        %v1681 = vmul.f32 %v778, %v778
        %v1682 = vmul.f32 %v780, %v780
        %v1683 = vmul.f32 %v782, %v782
        %v1684 = vmul.f32 %v786, %v786
        %v1685 = vmul.f32 %v788, %v788
        %v1686 = vmul.f32 %v790, %v790
        %v1687 = vmul.f32 %v792, %v792
        %v1688 = vmul.f32 %v796, %v796
        %v1689 = vmul.f32 %v798, %v798
        %v1690 = vmul.f32 %v800, %v800
        %v1691 = vmul.f32 %v802, %v802
        %v1692 = vmul.f32 %v806, %v806
        %v1693 = vmul.f32 %v808, %v808
        %v1694 = vmul.f32 %v810, %v810
        %v1695 = vmul.f32 %v812, %v812
        %v1696 = vadd.f32 %v1664, %v1665
        %1697 = vadd.xlane.f32.xlu0 %v1696
        %v1698 = vpop.xlane.xlu0 %1697
        %v1699 = vadd.f32 %v1666, %v1667
        %1700 = vadd.xlane.f32.xlu0 %v1699
        %v1701 = vpop.xlane.xlu0 %1700
        %v1702 = vadd.f32 %v1668, %v1669
        %1703 = vadd.xlane.f32.xlu0 %v1702
        %v1704 = vpop.xlane.xlu0 %1703
        %v1705 = vadd.f32 %v1670, %v1671
        %1706 = vadd.xlane.f32.xlu0 %v1705
        %v1707 = vpop.xlane.xlu0 %1706
        %v1708 = vadd.f32 %v1672, %v1673
        %1709 = vadd.xlane.f32.xlu0 %v1708
        %v1710 = vpop.xlane.xlu0 %1709
        %v1711 = vadd.f32 %v1674, %v1675
        %1712 = vadd.xlane.f32.xlu0 %v1711
        %v1713 = vpop.xlane.xlu0 %1712
        %v1714 = vadd.f32 %v1676, %v1677
        %1715 = vadd.xlane.f32.xlu0 %v1714
        %v1716 = vpop.xlane.xlu0 %1715
        %v1717 = vadd.f32 %v1678, %v1679
        %1718 = vadd.xlane.f32.xlu0 %v1717
        %v1719 = vpop.xlane.xlu0 %1718
        %v1720 = vadd.f32 %v1680, %v1681
        %1721 = vadd.xlane.f32.xlu0 %v1720
        %v1722 = vpop.xlane.xlu0 %1721
        %v1723 = vadd.f32 %v1682, %v1683
        %1724 = vadd.xlane.f32.xlu0 %v1723
        %v1725 = vpop.xlane.xlu0 %1724
        %v1726 = vadd.f32 %v1684, %v1685
        %1727 = vadd.xlane.f32.xlu0 %v1726
        %v1728 = vpop.xlane.xlu0 %1727
        %v1729 = vadd.f32 %v1686, %v1687
        %1730 = vadd.xlane.f32.xlu0 %v1729
        %v1731 = vpop.xlane.xlu0 %1730
        %v1732 = vadd.f32 %v1688, %v1689
        %1733 = vadd.xlane.f32.xlu0 %v1732
        %v1734 = vpop.xlane.xlu0 %1733
        %v1735 = vadd.f32 %v1690, %v1691
        %1736 = vadd.xlane.f32.xlu0 %v1735
        %v1737 = vpop.xlane.xlu0 %1736
        %v1738 = vadd.f32 %v1692, %v1693
        %1739 = vadd.xlane.f32.xlu0 %v1738
        %v1740 = vpop.xlane.xlu0 %1739
        %v1741 = vadd.f32 %v1694, %v1695
        %1742 = vadd.xlane.f32.xlu0 %v1741
        %v1743 = vpop.xlane.xlu0 %1742
        %v1744 = vadd.f32 %v1698, 1e-08
        %v1745 = vadd.f32 %v1701, 1e-08
        %v1746 = vadd.f32 %v1704, 1e-08
        %v1747 = vadd.f32 %v1707, 1e-08
        %v1748 = vadd.f32 %v1710, 1e-08
        %v1749 = vadd.f32 %v1713, 1e-08
        %v1750 = vadd.f32 %v1716, 1e-08
        %v1751 = vadd.f32 %v1719, 1e-08
        %v1752 = vadd.f32 %v1722, 1e-08
        %v1753 = vadd.f32 %v1725, 1e-08
        %v1754 = vadd.f32 %v1728, 1e-08
        %v1755 = vadd.f32 %v1731, 1e-08
        %v1756 = vadd.f32 %v1734, 1e-08
        %v1757 = vadd.f32 %v1737, 1e-08
        %v1758 = vadd.f32 %v1740, 1e-08
        %v1759 = vadd.f32 %v1743, 1e-08
        %v1760 = vrsqrt.pop %v1744
        %v1761 = vrsqrt.pop %v1745
        %v1762 = vrsqrt.pop %v1746
        %v1763 = vrsqrt.pop %v1747
        %v1764 = vrsqrt.pop %v1748
        %v1765 = vrsqrt.pop %v1749
        %v1766 = vrsqrt.pop %v1750
        %v1767 = vrsqrt.pop %v1751
        %v1768 = vrsqrt.pop %v1752
        %v1769 = vrsqrt.pop %v1753
        %v1770 = vrsqrt.pop %v1754
        %v1771 = vrsqrt.pop %v1755
        %v1772 = vrsqrt.pop %v1756
        %v1773 = vrsqrt.pop %v1757
        %v1774 = vrsqrt.pop %v1758
        %v1775 = vrsqrt.pop %v1759
        %v1776 = vmul.f32 %v736, %v1760
        %v1777 = vmul.f32 %v738, %v1760
        %v1778 = vmul.f32 %v740, %v1761
        %v1779 = vmul.f32 %v742, %v1761
        %v1780 = vmul.f32 %v746, %v1762
        %v1781 = vmul.f32 %v748, %v1762
        %v1782 = vmul.f32 %v750, %v1763
        %v1783 = vmul.f32 %v752, %v1763
        %v1784 = vmul.f32 %v756, %v1764
        %v1785 = vmul.f32 %v758, %v1764
        %v1786 = vmul.f32 %v760, %v1765
        %v1787 = vmul.f32 %v762, %v1765
        %v1788 = vmul.f32 %v766, %v1766
        %v1789 = vmul.f32 %v768, %v1766
        %v1790 = vmul.f32 %v770, %v1767
        %v1791 = vmul.f32 %v772, %v1767
        %v1792 = vmul.f32 %v776, %v1768
        %v1793 = vmul.f32 %v778, %v1768
        %v1794 = vmul.f32 %v780, %v1769
        %v1795 = vmul.f32 %v782, %v1769
        %v1796 = vmul.f32 %v786, %v1770
        %v1797 = vmul.f32 %v788, %v1770
        %v1798 = vmul.f32 %v790, %v1771
        %v1799 = vmul.f32 %v792, %v1771
        %v1800 = vmul.f32 %v796, %v1772
        %v1801 = vmul.f32 %v798, %v1772
        %v1802 = vmul.f32 %v800, %v1773
        %v1803 = vmul.f32 %v802, %v1773
        %v1804 = vmul.f32 %v806, %v1774
        %v1805 = vmul.f32 %v808, %v1774
        %v1806 = vmul.f32 %v810, %v1775
        %v1807 = vmul.f32 %v812, %v1775
        %v1808 = vmul.f32 %v1632, %v1632
        %v1809 = vmul.f32 %v1633, %v1633
        %v1810 = vmul.f32 %v1634, %v1634
        %v1811 = vmul.f32 %v1635, %v1635
        %v1812 = vmul.f32 %v1636, %v1636
        %v1813 = vmul.f32 %v1637, %v1637
        %v1814 = vmul.f32 %v1638, %v1638
        %v1815 = vmul.f32 %v1639, %v1639
        %v1816 = vmul.f32 %v1640, %v1640
        %v1817 = vmul.f32 %v1641, %v1641
        %v1818 = vmul.f32 %v1642, %v1642
        %v1819 = vmul.f32 %v1643, %v1643
        %v1820 = vmul.f32 %v1644, %v1644
        %v1821 = vmul.f32 %v1645, %v1645
        %v1822 = vmul.f32 %v1646, %v1646
        %v1823 = vmul.f32 %v1647, %v1647
        %v1824 = vmul.f32 %v1648, %v1648
        %v1825 = vmul.f32 %v1649, %v1649
        %v1826 = vmul.f32 %v1650, %v1650
        %v1827 = vmul.f32 %v1651, %v1651
        %v1828 = vmul.f32 %v1652, %v1652
        %v1829 = vmul.f32 %v1653, %v1653
        %v1830 = vmul.f32 %v1654, %v1654
        %v1831 = vmul.f32 %v1655, %v1655
        %v1832 = vmul.f32 %v1656, %v1656
        %v1833 = vmul.f32 %v1657, %v1657
        %v1834 = vmul.f32 %v1658, %v1658
        %v1835 = vmul.f32 %v1659, %v1659
        %v1836 = vmul.f32 %v1660, %v1660
        %v1837 = vmul.f32 %v1661, %v1661
        %v1838 = vmul.f32 %v1662, %v1662
        %v1839 = vmul.f32 %v1663, %v1663
        %v1840 = vadd.f32 %v1808, %v1809
        %1841 = vadd.xlane.f32.xlu0 %v1840
        %v1842 = vpop.xlane.xlu0 %1841
        %v1843 = vadd.f32 %v1810, %v1811
        %1844 = vadd.xlane.f32.xlu0 %v1843
        %v1845 = vpop.xlane.xlu0 %1844
        %v1846 = vadd.f32 %v1812, %v1813
        %1847 = vadd.xlane.f32.xlu0 %v1846
        %v1848 = vpop.xlane.xlu0 %1847
        %v1849 = vadd.f32 %v1814, %v1815
        %1850 = vadd.xlane.f32.xlu0 %v1849
        %v1851 = vpop.xlane.xlu0 %1850
        %v1852 = vadd.f32 %v1816, %v1817
        %1853 = vadd.xlane.f32.xlu0 %v1852
        %v1854 = vpop.xlane.xlu0 %1853
        %v1855 = vadd.f32 %v1818, %v1819
        %1856 = vadd.xlane.f32.xlu0 %v1855
        %v1857 = vpop.xlane.xlu0 %1856
        %v1858 = vadd.f32 %v1820, %v1821
        %1859 = vadd.xlane.f32.xlu0 %v1858
        %v1860 = vpop.xlane.xlu0 %1859
        %v1861 = vadd.f32 %v1822, %v1823
        %1862 = vadd.xlane.f32.xlu0 %v1861
        %v1863 = vpop.xlane.xlu0 %1862
        %v1864 = vadd.f32 %v1824, %v1825
        %1865 = vadd.xlane.f32.xlu0 %v1864
        %v1866 = vpop.xlane.xlu0 %1865
        %v1867 = vadd.f32 %v1826, %v1827
        %1868 = vadd.xlane.f32.xlu0 %v1867
        %v1869 = vpop.xlane.xlu0 %1868
        %v1870 = vadd.f32 %v1828, %v1829
        %1871 = vadd.xlane.f32.xlu0 %v1870
        %v1872 = vpop.xlane.xlu0 %1871
        %v1873 = vadd.f32 %v1830, %v1831
        %1874 = vadd.xlane.f32.xlu0 %v1873
        %v1875 = vpop.xlane.xlu0 %1874
        %v1876 = vadd.f32 %v1832, %v1833
        %1877 = vadd.xlane.f32.xlu0 %v1876
        %v1878 = vpop.xlane.xlu0 %1877
        %v1879 = vadd.f32 %v1834, %v1835
        %1880 = vadd.xlane.f32.xlu0 %v1879
        %v1881 = vpop.xlane.xlu0 %1880
        %v1882 = vadd.f32 %v1836, %v1837
        %1883 = vadd.xlane.f32.xlu0 %v1882
        %v1884 = vpop.xlane.xlu0 %1883
        %v1885 = vadd.f32 %v1838, %v1839
        %1886 = vadd.xlane.f32.xlu0 %v1885
        %v1887 = vpop.xlane.xlu0 %1886
        %v1888 = vadd.f32 %v1842, 1e-08
        %v1889 = vadd.f32 %v1845, 1e-08
        %v1890 = vadd.f32 %v1848, 1e-08
        %v1891 = vadd.f32 %v1851, 1e-08
        %v1892 = vadd.f32 %v1854, 1e-08
        %v1893 = vadd.f32 %v1857, 1e-08
        %v1894 = vadd.f32 %v1860, 1e-08
        %v1895 = vadd.f32 %v1863, 1e-08
        %v1896 = vadd.f32 %v1866, 1e-08
        %v1897 = vadd.f32 %v1869, 1e-08
        %v1898 = vadd.f32 %v1872, 1e-08
        %v1899 = vadd.f32 %v1875, 1e-08
        %v1900 = vadd.f32 %v1878, 1e-08
        %v1901 = vadd.f32 %v1881, 1e-08
        %v1902 = vadd.f32 %v1884, 1e-08
        %v1903 = vadd.f32 %v1887, 1e-08
        %v1904 = vrsqrt.pop %v1888
        %v1905 = vrsqrt.pop %v1889
        %v1906 = vrsqrt.pop %v1890
        %v1907 = vrsqrt.pop %v1891
        %v1908 = vrsqrt.pop %v1892
        %v1909 = vrsqrt.pop %v1893
        %v1910 = vrsqrt.pop %v1894
        %v1911 = vrsqrt.pop %v1895
        %v1912 = vrsqrt.pop %v1896
        %v1913 = vrsqrt.pop %v1897
        %v1914 = vrsqrt.pop %v1898
        %v1915 = vrsqrt.pop %v1899
        %v1916 = vrsqrt.pop %v1900
        %v1917 = vrsqrt.pop %v1901
        %v1918 = vrsqrt.pop %v1902
        %v1919 = vrsqrt.pop %v1903
        %v1920 = vmul.f32 %v1632, %v1904
        %v1921 = vmul.f32 %v1633, %v1904
        %v1922 = vmul.f32 %v1634, %v1905
        %v1923 = vmul.f32 %v1635, %v1905
        %v1924 = vmul.f32 %v1636, %v1906
        %v1925 = vmul.f32 %v1637, %v1906
        %v1926 = vmul.f32 %v1638, %v1907
        %v1927 = vmul.f32 %v1639, %v1907
        %v1928 = vmul.f32 %v1640, %v1908
        %v1929 = vmul.f32 %v1641, %v1908
        %v1930 = vmul.f32 %v1642, %v1909
        %v1931 = vmul.f32 %v1643, %v1909
        %v1932 = vmul.f32 %v1644, %v1910
        %v1933 = vmul.f32 %v1645, %v1910
        %v1934 = vmul.f32 %v1646, %v1911
        %v1935 = vmul.f32 %v1647, %v1911
        %v1936 = vmul.f32 %v1648, %v1912
        %v1937 = vmul.f32 %v1649, %v1912
        %v1938 = vmul.f32 %v1650, %v1913
        %v1939 = vmul.f32 %v1651, %v1913
        %v1940 = vmul.f32 %v1652, %v1914
        %v1941 = vmul.f32 %v1653, %v1914
        %v1942 = vmul.f32 %v1654, %v1915
        %v1943 = vmul.f32 %v1655, %v1915
        %v1944 = vmul.f32 %v1656, %v1916
        %v1945 = vmul.f32 %v1657, %v1916
        %v1946 = vmul.f32 %v1658, %v1917
        %v1947 = vmul.f32 %v1659, %v1917
        %v1948 = vmul.f32 %v1660, %v1918
        %v1949 = vmul.f32 %v1661, %v1918
        %v1950 = vmul.f32 %v1662, %v1919
        %v1951 = vmul.f32 %v1663, %v1919
        %v1952 = vmul.f32 %v1776, %v1920
        %v1953 = vmul.f32 %v1777, %v1921
        %v1954 = vmul.f32 %v1778, %v1922
        %v1955 = vmul.f32 %v1779, %v1923
        %v1956 = vmul.f32 %v1780, %v1924
        %v1957 = vmul.f32 %v1781, %v1925
        %v1958 = vmul.f32 %v1782, %v1926
        %v1959 = vmul.f32 %v1783, %v1927
        %v1960 = vmul.f32 %v1784, %v1928
        %v1961 = vmul.f32 %v1785, %v1929
        %v1962 = vmul.f32 %v1786, %v1930
        %v1963 = vmul.f32 %v1787, %v1931
        %v1964 = vmul.f32 %v1788, %v1932
        %v1965 = vmul.f32 %v1789, %v1933
        %v1966 = vmul.f32 %v1790, %v1934
        %v1967 = vmul.f32 %v1791, %v1935
        %v1968 = vmul.f32 %v1792, %v1936
        %v1969 = vmul.f32 %v1793, %v1937
        %v1970 = vmul.f32 %v1794, %v1938
        %v1971 = vmul.f32 %v1795, %v1939
        %v1972 = vmul.f32 %v1796, %v1940
        %v1973 = vmul.f32 %v1797, %v1941
        %v1974 = vmul.f32 %v1798, %v1942
        %v1975 = vmul.f32 %v1799, %v1943
        %v1976 = vmul.f32 %v1800, %v1944
        %v1977 = vmul.f32 %v1801, %v1945
        %v1978 = vmul.f32 %v1802, %v1946
        %v1979 = vmul.f32 %v1803, %v1947
        %v1980 = vmul.f32 %v1804, %v1948
        %v1981 = vmul.f32 %v1805, %v1949
        %v1982 = vmul.f32 %v1806, %v1950
        %v1983 = vmul.f32 %v1807, %v1951
        %v1984 = vadd.f32 %v1952, %v1953
        %1985 = vadd.xlane.f32.xlu0 %v1984
        %v1986 = vpop.xlane.xlu0 %1985
        %v1987 = vadd.f32 %v1954, %v1955
        %1988 = vadd.xlane.f32.xlu0 %v1987
        %v1989 = vpop.xlane.xlu0 %1988
        %v1990 = vadd.f32 %v1956, %v1957
        %1991 = vadd.xlane.f32.xlu0 %v1990
        %v1992 = vpop.xlane.xlu0 %1991
        %v1993 = vadd.f32 %v1958, %v1959
        %1994 = vadd.xlane.f32.xlu0 %v1993
        %v1995 = vpop.xlane.xlu0 %1994
        %v1996 = vadd.f32 %v1960, %v1961
        %1997 = vadd.xlane.f32.xlu0 %v1996
        %v1998 = vpop.xlane.xlu0 %1997
        %v1999 = vadd.f32 %v1962, %v1963
        %2000 = vadd.xlane.f32.xlu0 %v1999
        %v2001 = vpop.xlane.xlu0 %2000
        %v2002 = vadd.f32 %v1964, %v1965
        %2003 = vadd.xlane.f32.xlu0 %v2002
        %v2004 = vpop.xlane.xlu0 %2003
        %v2005 = vadd.f32 %v1966, %v1967
        %2006 = vadd.xlane.f32.xlu0 %v2005
        %v2007 = vpop.xlane.xlu0 %2006
        %v2008 = vadd.f32 %v1968, %v1969
        %2009 = vadd.xlane.f32.xlu0 %v2008
        %v2010 = vpop.xlane.xlu0 %2009
        %v2011 = vadd.f32 %v1970, %v1971
        %2012 = vadd.xlane.f32.xlu0 %v2011
        %v2013 = vpop.xlane.xlu0 %2012
        %v2014 = vadd.f32 %v1972, %v1973
        %2015 = vadd.xlane.f32.xlu0 %v2014
        %v2016 = vpop.xlane.xlu0 %2015
        %v2017 = vadd.f32 %v1974, %v1975
        %2018 = vadd.xlane.f32.xlu0 %v2017
        %v2019 = vpop.xlane.xlu0 %2018
        %v2020 = vadd.f32 %v1976, %v1977
        %2021 = vadd.xlane.f32.xlu0 %v2020
        %v2022 = vpop.xlane.xlu0 %2021
        %v2023 = vadd.f32 %v1978, %v1979
        %2024 = vadd.xlane.f32.xlu0 %v2023
        %v2025 = vpop.xlane.xlu0 %2024
        %v2026 = vadd.f32 %v1980, %v1981
        %2027 = vadd.xlane.f32.xlu0 %v2026
        %v2028 = vpop.xlane.xlu0 %2027
        %v2029 = vadd.f32 %v1982, %v1983
        %2030 = vadd.xlane.f32.xlu0 %v2029
        %v2031 = vpop.xlane.xlu0 %2030
        %vm2032 = vcmask 7168
        %2033 = vst.msk [vmem:[%s581] sm:$0xff] %vm2032, %v1986
        %2034 = vst.msk [vmem:[%s581 + $0x8] sm:$0xff] %vm2032, %v1989
        %2035 = vst.msk [vmem:[%s581 + $0x10] sm:$0xff] %vm2032, %v1992
        %2036 = vst.msk [vmem:[%s581 + $0x18] sm:$0xff] %vm2032, %v1995
        %2037 = vst.msk [vmem:[%s581 + $0x20] sm:$0xff] %vm2032, %v1998
        %2038 = vst.msk [vmem:[%s581 + $0x28] sm:$0xff] %vm2032, %v2001
        %2039 = vst.msk [vmem:[%s581 + $0x30] sm:$0xff] %vm2032, %v2004
        %2040 = vst.msk [vmem:[%s581 + $0x38] sm:$0xff] %vm2032, %v2007
        %2041 = vst.msk [vmem:[%s581 + $0x40] sm:$0xff] %vm2032, %v2010
        %2042 = vst.msk [vmem:[%s581 + $0x48] sm:$0xff] %vm2032, %v2013
        %2043 = vst.msk [vmem:[%s581 + $0x50] sm:$0xff] %vm2032, %v2016
        %2044 = vst.msk [vmem:[%s581 + $0x58] sm:$0xff] %vm2032, %v2019
        %2045 = vst.msk [vmem:[%s581 + $0x60] sm:$0xff] %vm2032, %v2022
        %2046 = vst.msk [vmem:[%s581 + $0x68] sm:$0xff] %vm2032, %v2025
        %2047 = vst.msk [vmem:[%s581 + $0x70] sm:$0xff] %vm2032, %v2028
        %2048 = vst.msk [vmem:[%s581 + $0x78] sm:$0xff] %vm2032, %v2031
        %v2049 = vpack.c.bf16 %v1778, %v1776
        %v2050 = vpack.c.bf16 %v1779, %v1777
        %v2051 = vpack.c.bf16 %v1782, %v1780
        %v2052 = vpack.c.bf16 %v1783, %v1781
        %v2053 = vpack.c.bf16 %v1786, %v1784
        %v2054 = vpack.c.bf16 %v1787, %v1785
        %v2055 = vpack.c.bf16 %v1790, %v1788
        %v2056 = vpack.c.bf16 %v1791, %v1789
        %v2057 = vpack.c.bf16 %v1794, %v1792
        %v2058 = vpack.c.bf16 %v1795, %v1793
        %v2059 = vpack.c.bf16 %v1798, %v1796
        %v2060 = vpack.c.bf16 %v1799, %v1797
        %v2061 = vpack.c.bf16 %v1802, %v1800
        %v2062 = vpack.c.bf16 %v1803, %v1801
        %v2063 = vpack.c.bf16 %v1806, %v1804
        %v2064 = vpack.c.bf16 %v1807, %v1805
        %v2081 = vunpack.c.l.b16 %v2049
        %v2082 = vunpack.c.l.b16 %v2050
        %v2083 = vunpack.c.h.b16 %v2049
        %v2084 = vunpack.c.h.b16 %v2050
        %v2085 = vunpack.c.l.b16 %v2051
        %v2086 = vunpack.c.l.b16 %v2052
        %v2087 = vunpack.c.h.b16 %v2051
        %v2088 = vunpack.c.h.b16 %v2052
        %v2089 = vunpack.c.l.b16 %v2053
        %v2090 = vunpack.c.l.b16 %v2054
        %v2091 = vunpack.c.h.b16 %v2053
        %v2092 = vunpack.c.h.b16 %v2054
        %v2093 = vunpack.c.l.b16 %v2055
        %v2094 = vunpack.c.l.b16 %v2056
        %v2095 = vunpack.c.h.b16 %v2055
        %v2096 = vunpack.c.h.b16 %v2056
        %v2097 = vunpack.c.l.b16 %v2057
        %v2098 = vunpack.c.l.b16 %v2058
        %v2099 = vunpack.c.h.b16 %v2057
        %v2100 = vunpack.c.h.b16 %v2058
        %v2101 = vunpack.c.l.b16 %v2059
        %v2102 = vunpack.c.l.b16 %v2060
        %v2103 = vunpack.c.h.b16 %v2059
        %v2104 = vunpack.c.h.b16 %v2060
        %v2105 = vunpack.c.l.b16 %v2061
        %v2106 = vunpack.c.l.b16 %v2062
        %v2107 = vunpack.c.h.b16 %v2061
        %v2108 = vunpack.c.h.b16 %v2062
        %v2109 = vunpack.c.l.b16 %v2063
        %v2110 = vunpack.c.l.b16 %v2064
        %v2111 = vunpack.c.h.b16 %v2063
        %v2112 = vunpack.c.h.b16 %v2064
        %v2113 = vpack.c.b16 %v2082, %v2081
        %v2114 = vpack.c.b16 %v2084, %v2083
        %v2115 = vpack.c.b16 %v2086, %v2085
        %v2116 = vpack.c.b16 %v2088, %v2087
        %v2117 = vpack.c.b16 %v2090, %v2089
        %v2118 = vpack.c.b16 %v2092, %v2091
        %v2119 = vpack.c.b16 %v2094, %v2093
        %v2120 = vpack.c.b16 %v2096, %v2095
        %v2121 = vpack.c.b16 %v2098, %v2097
        %v2122 = vpack.c.b16 %v2100, %v2099
        %v2123 = vpack.c.b16 %v2102, %v2101
        %v2124 = vpack.c.b16 %v2104, %v2103
        %v2125 = vpack.c.b16 %v2106, %v2105
        %v2126 = vpack.c.b16 %v2108, %v2107
        %v2127 = vpack.c.b16 %v2110, %v2109
        %v2128 = vpack.c.b16 %v2112, %v2111
        %2145 = vst [vmem:[%s542] sm:$0xff] %v2113
        %2146 = vst [vmem:[%s542 + $0x8] sm:$0xff] %v2114
        %2147 = vst [vmem:[%s542 + $0x10] sm:$0xff] %v2115
        %2148 = vst [vmem:[%s542 + $0x18] sm:$0xff] %v2116
        %2149 = vst [vmem:[%s542 + $0x20] sm:$0xff] %v2117
        %2150 = vst [vmem:[%s542 + $0x28] sm:$0xff] %v2118
        %2151 = vst [vmem:[%s542 + $0x30] sm:$0xff] %v2119
        %2152 = vst [vmem:[%s542 + $0x38] sm:$0xff] %v2120
        %2153 = vst [vmem:[%s542 + $0x40] sm:$0xff] %v2121
        %2154 = vst [vmem:[%s542 + $0x48] sm:$0xff] %v2122
        %2155 = vst [vmem:[%s542 + $0x50] sm:$0xff] %v2123
        %2156 = vst [vmem:[%s542 + $0x58] sm:$0xff] %v2124
        %2157 = vst [vmem:[%s542 + $0x60] sm:$0xff] %v2125
        %2158 = vst [vmem:[%s542 + $0x68] sm:$0xff] %v2126
        %2159 = vst [vmem:[%s542 + $0x70] sm:$0xff] %v2127
        %2160 = vst [vmem:[%s542 + $0x78] sm:$0xff] %v2128
        %v2161 = vpack.c.bf16 %v1922, %v1920
        %v2162 = vpack.c.bf16 %v1923, %v1921
        %v2163 = vpack.c.bf16 %v1926, %v1924
        %v2164 = vpack.c.bf16 %v1927, %v1925
        %v2165 = vpack.c.bf16 %v1930, %v1928
        %v2166 = vpack.c.bf16 %v1931, %v1929
        %v2167 = vpack.c.bf16 %v1934, %v1932
        %v2168 = vpack.c.bf16 %v1935, %v1933
        %v2169 = vpack.c.bf16 %v1938, %v1936
        %v2170 = vpack.c.bf16 %v1939, %v1937
        %v2171 = vpack.c.bf16 %v1942, %v1940
        %v2172 = vpack.c.bf16 %v1943, %v1941
        %v2173 = vpack.c.bf16 %v1946, %v1944
        %v2174 = vpack.c.bf16 %v1947, %v1945
        %v2175 = vpack.c.bf16 %v1950, %v1948
        %v2176 = vpack.c.bf16 %v1951, %v1949
        %v2193 = vunpack.c.l.b16 %v2161
        %v2194 = vunpack.c.l.b16 %v2162
        %v2195 = vunpack.c.h.b16 %v2161
        %v2196 = vunpack.c.h.b16 %v2162
        %v2197 = vunpack.c.l.b16 %v2163
        %v2198 = vunpack.c.l.b16 %v2164
        %v2199 = vunpack.c.h.b16 %v2163
        %v2200 = vunpack.c.h.b16 %v2164
        %v2201 = vunpack.c.l.b16 %v2165
        %v2202 = vunpack.c.l.b16 %v2166
        %v2203 = vunpack.c.h.b16 %v2165
        %v2204 = vunpack.c.h.b16 %v2166
        %v2205 = vunpack.c.l.b16 %v2167
        %v2206 = vunpack.c.l.b16 %v2168
        %v2207 = vunpack.c.h.b16 %v2167
        %v2208 = vunpack.c.h.b16 %v2168
        %v2209 = vunpack.c.l.b16 %v2169
        %v2210 = vunpack.c.l.b16 %v2170
        %v2211 = vunpack.c.h.b16 %v2169
        %v2212 = vunpack.c.h.b16 %v2170
        %v2213 = vunpack.c.l.b16 %v2171
        %v2214 = vunpack.c.l.b16 %v2172
        %v2215 = vunpack.c.h.b16 %v2171
        %v2216 = vunpack.c.h.b16 %v2172
        %v2217 = vunpack.c.l.b16 %v2173
        %v2218 = vunpack.c.l.b16 %v2174
        %v2219 = vunpack.c.h.b16 %v2173
        %v2220 = vunpack.c.h.b16 %v2174
        %v2221 = vunpack.c.l.b16 %v2175
        %v2222 = vunpack.c.l.b16 %v2176
        %v2223 = vunpack.c.h.b16 %v2175
        %v2224 = vunpack.c.h.b16 %v2176
        %v2225 = vpack.c.b16 %v2194, %v2193
        %v2226 = vpack.c.b16 %v2196, %v2195
        %v2227 = vpack.c.b16 %v2198, %v2197
        %v2228 = vpack.c.b16 %v2200, %v2199
        %v2229 = vpack.c.b16 %v2202, %v2201
        %v2230 = vpack.c.b16 %v2204, %v2203
        %v2231 = vpack.c.b16 %v2206, %v2205
        %v2232 = vpack.c.b16 %v2208, %v2207
        %v2233 = vpack.c.b16 %v2210, %v2209
        %v2234 = vpack.c.b16 %v2212, %v2211
        %v2235 = vpack.c.b16 %v2214, %v2213
        %v2236 = vpack.c.b16 %v2216, %v2215
        %v2237 = vpack.c.b16 %v2218, %v2217
        %v2238 = vpack.c.b16 %v2220, %v2219
        %v2239 = vpack.c.b16 %v2222, %v2221
        %v2240 = vpack.c.b16 %v2224, %v2223
        %2257 = vst [vmem:[%s549] sm:$0xff] %v2225
        %2258 = vst [vmem:[%s549 + $0x8] sm:$0xff] %v2226
        %2259 = vst [vmem:[%s549 + $0x10] sm:$0xff] %v2227
        %2260 = vst [vmem:[%s549 + $0x18] sm:$0xff] %v2228
        %2261 = vst [vmem:[%s549 + $0x20] sm:$0xff] %v2229
        %2262 = vst [vmem:[%s549 + $0x28] sm:$0xff] %v2230
        %2263 = vst [vmem:[%s549 + $0x30] sm:$0xff] %v2231
        %2264 = vst [vmem:[%s549 + $0x38] sm:$0xff] %v2232
        %2265 = vst [vmem:[%s549 + $0x40] sm:$0xff] %v2233
        %2266 = vst [vmem:[%s549 + $0x48] sm:$0xff] %v2234
        %2267 = vst [vmem:[%s549 + $0x50] sm:$0xff] %v2235
        %2268 = vst [vmem:[%s549 + $0x58] sm:$0xff] %v2236
        %2269 = vst [vmem:[%s549 + $0x60] sm:$0xff] %v2237
        %2270 = vst [vmem:[%s549 + $0x68] sm:$0xff] %v2238
        %2271 = vst [vmem:[%s549 + $0x70] sm:$0xff] %v2239
        %2272 = vst [vmem:[%s549 + $0x78] sm:$0xff] %v2240
        %v2273 = vpack.c.bf16 %v1149, %v1147
        %v2274 = vpack.c.bf16 %v1153, %v1151
        %v2275 = vpack.c.bf16 %v1157, %v1155
        %v2276 = vpack.c.bf16 %v1161, %v1159
        %v2277 = vpack.c.bf16 %v1165, %v1163
        %v2278 = vpack.c.bf16 %v1169, %v1167
        %v2279 = vpack.c.bf16 %v1173, %v1171
        %v2280 = vpack.c.bf16 %v1177, %v1175
        %v2281 = vld [vmem:[%s9] sm:$0xf]
        %v2282 = vld [vmem:[%s9 + $0x4] sm:$0xf]
        %v2283 = vld [vmem:[%s9 + $0x8] sm:$0xf]
        %v2284 = vld [vmem:[%s9 + $0xc] sm:$0xf]
        %v2285 = vld [vmem:[%s9 + $0x10] sm:$0xf]
        %v2286 = vld [vmem:[%s9 + $0x14] sm:$0xf]
        %v2287 = vld [vmem:[%s9 + $0x18] sm:$0xf]
        %v2288 = vld [vmem:[%s9 + $0x1c] sm:$0xf]
        %v2289 = vld [vmem:[%s9 + $0x20] sm:$0xf]
        %v2290 = vld [vmem:[%s9 + $0x24] sm:$0xf]
        %v2291 = vld [vmem:[%s9 + $0x28] sm:$0xf]
        %v2292 = vld [vmem:[%s9 + $0x2c] sm:$0xf]
        %v2293 = vld [vmem:[%s9 + $0x30] sm:$0xf]
        %v2294 = vld [vmem:[%s9 + $0x34] sm:$0xf]
        %v2295 = vld [vmem:[%s9 + $0x38] sm:$0xf]
        %v2296 = vld [vmem:[%s9 + $0x3c] sm:$0xf]
        %v2297 = vld [vmem:[%s10] sm:$0x1]
        %v2299 = vlaneseq
        %v2300 = vshrl.u32 %v2299, 7
        %v2301 = vsub.s32 0, %v2300
        %v2302 = vrot.slane %v2297, %v2301
        %v2320 = vunpack.c.l.b16 %v2281
        %v2321 = vunpack.c.l.b16 %v2282
        %v2322 = vunpack.c.l.b16 %v2283
        %v2323 = vunpack.c.l.b16 %v2284
        %v2324 = vunpack.c.l.b16 %v2285
        %v2325 = vunpack.c.l.b16 %v2286
        %v2326 = vunpack.c.l.b16 %v2287
        %v2327 = vunpack.c.l.b16 %v2288
        %v2328 = vunpack.c.l.b16 %v2289
        %v2329 = vunpack.c.l.b16 %v2290
        %v2330 = vunpack.c.l.b16 %v2291
        %v2331 = vunpack.c.l.b16 %v2292
        %v2332 = vunpack.c.l.b16 %v2293
        %v2333 = vunpack.c.l.b16 %v2294
        %v2334 = vunpack.c.l.b16 %v2295
        %v2335 = vunpack.c.l.b16 %v2296
        %v2336 = vpack.c.b16 %v2321, %v2320
        %v2337 = vpack.c.b16 %v2323, %v2322
        %v2338 = vpack.c.b16 %v2325, %v2324
        %v2339 = vpack.c.b16 %v2327, %v2326
        %v2340 = vpack.c.b16 %v2329, %v2328
        %v2341 = vpack.c.b16 %v2331, %v2330
        %v2342 = vpack.c.b16 %v2333, %v2332
        %v2343 = vpack.c.b16 %v2335, %v2334
        %2352 = vmatprep.subr.bf16.mxu0 0
        %2353 = vmatpush1.bf16.msra.mxu0 %v2336
        %2354 = vmatprep.subr.bf16.mxu0 0
        %2355 = vmatpush1.bf16.msra.mxu0 %v2337
        %2356 = vmatprep.subr.bf16.mxu0 0
        %2357 = vmatpush1.bf16.msra.mxu0 %v2338
        %2358 = vmatprep.subr.bf16.mxu0 0
        %2359 = vmatpush1.bf16.msra.mxu0 %v2339
        %2360 = vmatprep.subr.bf16.mxu0 0
        %2361 = vmatpush1.bf16.msra.mxu0 %v2340
        %2362 = vmatprep.subr.bf16.mxu0 0
        %2363 = vmatpush1.bf16.msra.mxu0 %v2341
        %2364 = vmatprep.subr.bf16.mxu0 0
        %2365 = vmatpush1.bf16.msra.mxu0 %v2342
        %2366 = vmatprep.subr.bf16.mxu0 0
        %2367 = vmatpush1.bf16.msra.mxu0 %v2343
        %2368 = vmatprep.subr.bf16.mxu0 0
        %2369 = vmatpush1.bf16.msra.mxu0 0
        %2370 = vmatprep.subr.bf16.mxu0 0
        %2371 = vmatpush1.bf16.msra.mxu0 0
        %2372 = vmatprep.subr.bf16.mxu0 0
        %2373 = vmatpush1.bf16.msra.mxu0 0
        %2374 = vmatprep.subr.bf16.mxu0 0
        %2375 = vmatpush1.bf16.msra.mxu0 0
        %2376 = vmatprep.subr.bf16.mxu0 0
        %2377 = vmatpush1.bf16.msra.mxu0 0
        %2378 = vmatprep.subr.bf16.mxu0 0
        %2379 = vmatpush1.bf16.msra.mxu0 0
        %2380 = vmatprep.subr.bf16.mxu0 0
        %2381 = vmatpush1.bf16.msra.mxu0 0
        %2382 = vmatprep.subr.bf16.mxu0 0
        %2383 = vmatpush1.bf16.msra.mxu0 0
        %2384 = vmatprep.mubr.bf16.mxu0 0
        %2385 = vmatmul.mubr.bf16.gmra.mrb[0].mxu0 %v2273
        %v2386 = vpop.f32.mrb[0].mxu0
        %v2387 = vadd.f32 %v2302, %v2386
        %v2388 = vpop.f32.mrb[0].mxu0
        %v2389 = vpop.f32.mrb[0].mxu0
        %v2390 = vadd.f32 %v2302, %v2389
        %v2391 = vpop.f32.mrb[0].mxu0
        %2392 = vmatprep.mubr.bf16.mxu0 0
        %2393 = vmatmul.mubr.bf16.gmra.mrb[0].mxu0 %v2274
        %v2394 = vpop.f32.mrb[0].mxu0
        %v2395 = vadd.f32 %v2302, %v2394
        %v2396 = vpop.f32.mrb[0].mxu0
        %v2397 = vpop.f32.mrb[0].mxu0
        %v2398 = vadd.f32 %v2302, %v2397
        %v2399 = vpop.f32.mrb[0].mxu0
        %2400 = vmatprep.mubr.bf16.mxu0 0
        %2401 = vmatmul.mubr.bf16.gmra.mrb[0].mxu0 %v2275
        %v2402 = vpop.f32.mrb[0].mxu0
        %v2403 = vadd.f32 %v2302, %v2402
        %v2404 = vpop.f32.mrb[0].mxu0
        %v2405 = vpop.f32.mrb[0].mxu0
        %v2406 = vadd.f32 %v2302, %v2405
        %v2407 = vpop.f32.mrb[0].mxu0
        %2408 = vmatprep.mubr.bf16.mxu0 0
        %2409 = vmatmul.mubr.bf16.gmra.mrb[0].mxu0 %v2276
        %v2410 = vpop.f32.mrb[0].mxu0
        %v2411 = vadd.f32 %v2302, %v2410
        %v2412 = vpop.f32.mrb[0].mxu0
        %v2413 = vpop.f32.mrb[0].mxu0
        %v2414 = vadd.f32 %v2302, %v2413
        %v2415 = vpop.f32.mrb[0].mxu0
        %2416 = vmatprep.mubr.bf16.mxu0 0
        %2417 = vmatmul.mubr.bf16.gmra.mrb[0].mxu0 %v2277
        %v2418 = vpop.f32.mrb[0].mxu0
        %v2419 = vadd.f32 %v2302, %v2418
        %v2420 = vpop.f32.mrb[0].mxu0
        %v2421 = vpop.f32.mrb[0].mxu0
        %v2422 = vadd.f32 %v2302, %v2421
        %v2423 = vpop.f32.mrb[0].mxu0
        %2424 = vmatprep.mubr.bf16.mxu0 0
        %2425 = vmatmul.mubr.bf16.gmra.mrb[0].mxu0 %v2278
        %v2426 = vpop.f32.mrb[0].mxu0
        %v2427 = vadd.f32 %v2302, %v2426
        %v2428 = vpop.f32.mrb[0].mxu0
        %v2429 = vpop.f32.mrb[0].mxu0
        %v2430 = vadd.f32 %v2302, %v2429
        %v2431 = vpop.f32.mrb[0].mxu0
        %2432 = vmatprep.mubr.bf16.mxu0 0
        %2433 = vmatmul.mubr.bf16.gmra.mrb[0].mxu0 %v2279
        %v2434 = vpop.f32.mrb[0].mxu0
        %v2435 = vadd.f32 %v2302, %v2434
        %v2436 = vpop.f32.mrb[0].mxu0
        %v2437 = vpop.f32.mrb[0].mxu0
        %v2438 = vadd.f32 %v2302, %v2437
        %v2439 = vpop.f32.mrb[0].mxu0
        %2440 = vmatprep.mubr.bf16.mxu0 0
        %2441 = vmatmul.mubr.bf16.gmra.mrb[0].mxu0 %v2280
        %v2442 = vpop.f32.mrb[0].mxu0
        %v2443 = vadd.f32 %v2302, %v2442
        %v2444 = vpop.f32.mrb[0].mxu0
        %v2445 = vpop.f32.mrb[0].mxu0
        %v2446 = vadd.f32 %v2302, %v2445
        %v2447 = vpop.f32.mrb[0].mxu0
        %2448 = vdwg.mxu0
        %v2449 = vmax.f32 %v2387, 0.0
        %v2450 = vmax.f32 %v2390, 0.0
        %v2451 = vmax.f32 %v2395, 0.0
        %v2452 = vmax.f32 %v2398, 0.0
        %v2453 = vmax.f32 %v2403, 0.0
        %v2454 = vmax.f32 %v2406, 0.0
        %v2455 = vmax.f32 %v2411, 0.0
        %v2456 = vmax.f32 %v2414, 0.0
        %v2457 = vmax.f32 %v2419, 0.0
        %v2458 = vmax.f32 %v2422, 0.0
        %v2459 = vmax.f32 %v2427, 0.0
        %v2460 = vmax.f32 %v2430, 0.0
        %v2461 = vmax.f32 %v2435, 0.0
        %v2462 = vmax.f32 %v2438, 0.0
        %v2463 = vmax.f32 %v2443, 0.0
        %v2464 = vmax.f32 %v2446, 0.0
        %v2465 = vpack.c.bf16 %v2450, %v2449
        %v2466 = vpack.c.bf16 %v2452, %v2451
        %v2467 = vpack.c.bf16 %v2454, %v2453
        %v2468 = vpack.c.bf16 %v2456, %v2455
        %v2469 = vpack.c.bf16 %v2458, %v2457
        %v2470 = vpack.c.bf16 %v2460, %v2459
        %v2471 = vpack.c.bf16 %v2462, %v2461
        %v2472 = vpack.c.bf16 %v2464, %v2463
        %v2473 = vld [vmem:[%s11] sm:$0xf]
        %v2474 = vld [vmem:[%s11 + $0x4] sm:$0xf]
        %v2475 = vld [vmem:[%s11 + $0x8] sm:$0xf]
        %v2476 = vld [vmem:[%s11 + $0xc] sm:$0xf]
        %v2477 = vld [vmem:[%s11 + $0x10] sm:$0xf]
        %v2478 = vld [vmem:[%s11 + $0x14] sm:$0xf]
        %v2479 = vld [vmem:[%s11 + $0x18] sm:$0xf]
        %v2480 = vld [vmem:[%s11 + $0x1c] sm:$0xf]
        %v2481 = vld [vmem:[%s12] sm:$0x1]
        %v2483 = vlaneseq
        %v2484 = vshrl.u32 %v2483, 7
        %v2485 = vsub.s32 0, %v2484
        %v2486 = vrot.slane %v2481, %v2485
        %v2496 = vunpack.c.l.b16 %v2473
        %v2497 = vunpack.c.l.b16 %v2474
        %v2498 = vunpack.c.l.b16 %v2475
        %v2499 = vunpack.c.l.b16 %v2476
        %v2500 = vunpack.c.l.b16 %v2477
        %v2501 = vunpack.c.l.b16 %v2478
        %v2502 = vunpack.c.l.b16 %v2479
        %v2503 = vunpack.c.l.b16 %v2480
        %v2504 = vpack.c.b16 %v2497, %v2496
        %v2505 = vpack.c.b16 %v2499, %v2498
        %v2506 = vpack.c.b16 %v2501, %v2500
        %v2507 = vpack.c.b16 %v2503, %v2502
        %v2513 = vsel %vm1202, %v2465, 0
        %v2516 = vsel %vm1202, %v2466, 0
        %v2519 = vsel %vm1202, %v2467, 0
        %v2522 = vsel %vm1202, %v2468, 0
        %v2525 = vsel %vm1202, %v2469, 0
        %v2528 = vsel %vm1202, %v2470, 0
        %v2531 = vsel %vm1202, %v2471, 0
        %v2534 = vsel %vm1202, %v2472, 0
        %2536 = vmatprep.subr.bf16.mxu0 0
        %2537 = vmatpush1.bf16.msra.mxu0 %v2504
        %2538 = vmatprep.subr.bf16.mxu0 0
        %2539 = vmatpush1.bf16.msra.mxu0 %v2505
        %2540 = vmatprep.subr.bf16.mxu0 0
        %2541 = vmatpush1.bf16.msra.mxu0 %v2506
        %2542 = vmatprep.subr.bf16.mxu0 0
        %2543 = vmatpush1.bf16.msra.mxu0 %v2507
        %2544 = vmatprep.subr.bf16.mxu0 0
        %2545 = vmatpush1.bf16.msra.mxu0 0
        %2546 = vmatprep.subr.bf16.mxu0 0
        %2547 = vmatpush1.bf16.msra.mxu0 0
        %2548 = vmatprep.subr.bf16.mxu0 0
        %2549 = vmatpush1.bf16.msra.mxu0 0
        %2550 = vmatprep.subr.bf16.mxu0 0
        %2551 = vmatpush1.bf16.msra.mxu0 0
        %2552 = vmatprep.subr.bf16.mxu0 0
        %2553 = vmatpush1.bf16.msra.mxu0 0
        %2554 = vmatprep.subr.bf16.mxu0 0
        %2555 = vmatpush1.bf16.msra.mxu0 0
        %2556 = vmatprep.subr.bf16.mxu0 0
        %2557 = vmatpush1.bf16.msra.mxu0 0
        %2558 = vmatprep.subr.bf16.mxu0 0
        %2559 = vmatpush1.bf16.msra.mxu0 0
        %2560 = vmatprep.subr.bf16.mxu0 0
        %2561 = vmatpush1.bf16.msra.mxu0 0
        %2562 = vmatprep.subr.bf16.mxu0 0
        %2563 = vmatpush1.bf16.msra.mxu0 0
        %2564 = vmatprep.subr.bf16.mxu0 0
        %2565 = vmatpush1.bf16.msra.mxu0 0
        %2566 = vmatprep.subr.bf16.mxu0 0
        %2567 = vmatpush1.bf16.msra.mxu0 0
        %2568 = vmatprep.mubr.bf16.mxu0 0
        %2569 = vmatmul.mubr.bf16.gmra.mrb[0].mxu0 %v2513
        %v2570 = vpop.f32.mrb[0].mxu0
        %v2571 = vadd.f32 %v2486, %v2570
        %v2572 = vpop.f32.mrb[0].mxu0
        %v2573 = vpop.f32.mrb[0].mxu0
        %v2574 = vadd.f32 %v2486, %v2573
        %v2575 = vpop.f32.mrb[0].mxu0
        %2576 = vmatprep.mubr.bf16.mxu0 0
        %2577 = vmatmul.mubr.bf16.gmra.mrb[0].mxu0 %v2516
        %v2578 = vpop.f32.mrb[0].mxu0
        %v2579 = vadd.f32 %v2486, %v2578
        %v2580 = vpop.f32.mrb[0].mxu0
        %v2581 = vpop.f32.mrb[0].mxu0
        %v2582 = vadd.f32 %v2486, %v2581
        %v2583 = vpop.f32.mrb[0].mxu0
        %2584 = vmatprep.mubr.bf16.mxu0 0
        %2585 = vmatmul.mubr.bf16.gmra.mrb[0].mxu0 %v2519
        %v2586 = vpop.f32.mrb[0].mxu0
        %v2587 = vadd.f32 %v2486, %v2586
        %v2588 = vpop.f32.mrb[0].mxu0
        %v2589 = vpop.f32.mrb[0].mxu0
        %v2590 = vadd.f32 %v2486, %v2589
        %v2591 = vpop.f32.mrb[0].mxu0
        %2592 = vmatprep.mubr.bf16.mxu0 0
        %2593 = vmatmul.mubr.bf16.gmra.mrb[0].mxu0 %v2522
        %v2594 = vpop.f32.mrb[0].mxu0
        %v2595 = vadd.f32 %v2486, %v2594
        %v2596 = vpop.f32.mrb[0].mxu0
        %v2597 = vpop.f32.mrb[0].mxu0
        %v2598 = vadd.f32 %v2486, %v2597
        %v2599 = vpop.f32.mrb[0].mxu0
        %2600 = vmatprep.mubr.bf16.mxu0 0
        %2601 = vmatmul.mubr.bf16.gmra.mrb[0].mxu0 %v2525
        %v2602 = vpop.f32.mrb[0].mxu0
        %v2603 = vadd.f32 %v2486, %v2602
        %v2604 = vpop.f32.mrb[0].mxu0
        %v2605 = vpop.f32.mrb[0].mxu0
        %v2606 = vadd.f32 %v2486, %v2605
        %v2607 = vpop.f32.mrb[0].mxu0
        %2608 = vmatprep.mubr.bf16.mxu0 0
        %2609 = vmatmul.mubr.bf16.gmra.mrb[0].mxu0 %v2528
        %v2610 = vpop.f32.mrb[0].mxu0
        %v2611 = vadd.f32 %v2486, %v2610
        %v2612 = vpop.f32.mrb[0].mxu0
        %v2613 = vpop.f32.mrb[0].mxu0
        %v2614 = vadd.f32 %v2486, %v2613
        %v2615 = vpop.f32.mrb[0].mxu0
        %2616 = vmatprep.mubr.bf16.mxu0 0
        %2617 = vmatmul.mubr.bf16.gmra.mrb[0].mxu0 %v2531
        %v2618 = vpop.f32.mrb[0].mxu0
        %v2619 = vadd.f32 %v2486, %v2618
        %v2620 = vpop.f32.mrb[0].mxu0
        %v2621 = vpop.f32.mrb[0].mxu0
        %v2622 = vadd.f32 %v2486, %v2621
        %v2623 = vpop.f32.mrb[0].mxu0
        %2624 = vmatprep.mubr.bf16.mxu0 0
        %2625 = vmatmul.mubr.bf16.gmra.mrb[0].mxu0 %v2534
        %v2626 = vpop.f32.mrb[0].mxu0
        %v2627 = vadd.f32 %v2486, %v2626
        %v2628 = vpop.f32.mrb[0].mxu0
        %v2629 = vpop.f32.mrb[0].mxu0
        %v2630 = vadd.f32 %v2486, %v2629
        %v2631 = vpop.f32.mrb[0].mxu0
        %2632 = vdwg.mxu0
        %vm2633 = vcmask 64512
        %2634 = vst.msk [vmem:[%s573] sm:$0xff] %vm2633, %v2571
        %2635 = vst.msk [vmem:[%s573 + $0x8] sm:$0xff] %vm2633, %v2574
        %2636 = vst.msk [vmem:[%s573 + $0x10] sm:$0xff] %vm2633, %v2579
        %2637 = vst.msk [vmem:[%s573 + $0x18] sm:$0xff] %vm2633, %v2582
        %2638 = vst.msk [vmem:[%s573 + $0x20] sm:$0xff] %vm2633, %v2587
        %2639 = vst.msk [vmem:[%s573 + $0x28] sm:$0xff] %vm2633, %v2590
        %2640 = vst.msk [vmem:[%s573 + $0x30] sm:$0xff] %vm2633, %v2595
        %2641 = vst.msk [vmem:[%s573 + $0x38] sm:$0xff] %vm2633, %v2598
        %2642 = vst.msk [vmem:[%s573 + $0x40] sm:$0xff] %vm2633, %v2603
        %2643 = vst.msk [vmem:[%s573 + $0x48] sm:$0xff] %vm2633, %v2606
        %2644 = vst.msk [vmem:[%s573 + $0x50] sm:$0xff] %vm2633, %v2611
        %2645 = vst.msk [vmem:[%s573 + $0x58] sm:$0xff] %vm2633, %v2614
        %2646 = vst.msk [vmem:[%s573 + $0x60] sm:$0xff] %vm2633, %v2619
        %2647 = vst.msk [vmem:[%s573 + $0x68] sm:$0xff] %vm2633, %v2622
        %2648 = vst.msk [vmem:[%s573 + $0x70] sm:$0xff] %vm2633, %v2627
        %2649 = vst.msk [vmem:[%s573 + $0x78] sm:$0xff] %vm2633, %v2630
        %s2650 = smul.u32 16, %s34
        %p2651 = scmp.lt.s32.totalorder %s2650, 31
        %s2652 = scalar_select %p2651, %s2650, 31
        %s2653 = smul.addr %s2652, 8
        %s2654 = scalar_lea.vmem %s13, %s2653
        %s2655 = sand.u32 %s351, 1
        %s2656 = scalar_lea.sflag [#allocation3], %s2655
        %s2657 = sand.u32 %s351, 1
        %s2658 = smul.addr %s2657, 128
        %s2659 = scalar_lea.vmem [#allocation2], %s2658
        %s2660 = sand.u32 %s377, 1
        %s2661 = scalar_lea.sflag [#allocation5], %s2660
        %s2662 = sand.u32 %s377, 1
        %s2663 = smul.addr %s2662, 128
        %s2664 = scalar_lea.vmem [#allocation4], %s2663
        %s2665 = smul.u32 16, %s34
        %p2666 = scmp.lt.s32.totalorder %s2665, 31
        %s2667 = scalar_select %p2666, %s2665, 31
        %s2668 = smul.addr %s2667, 8
        %s2669 = scalar_lea.vmem %s16, %s2668
        // Predicated region
        $region73: #{tpu_custom_call.1} parent=71 // pred_check
          %p2670 = pneg %p335
        $region74: #{tpu_custom_call.1} parent=71 // pred_check_branch
          %2672 = sbr.rel (%p2670) target = $region76
        $region75: #{tpu_custom_call.1} parent=71 // pred_region
          %s2673 = smul.u32 16, %s34
        $region76: #{tpu_custom_call.1} parent=71 // pred_fallthru
          _
        // Predicated region
        $region77: #{tpu_custom_call.1} parent=71 // pred_check
          %p2674 = pneg %p361
        $region78: #{tpu_custom_call.1} parent=71 // pred_check_branch
          %2676 = sbr.rel (%p2674) target = $region80
        $region79: #{tpu_custom_call.1} parent=71 // pred_region
          %s2677 = smul.u32 16, %s34
          %s2679 = ssub.s32 2048, 2048
          %2680 = vsyncadd %s2656, %s2679
          %s2681 = smul.addr %s2677, 2
          %s2682 = smul.addr %s2681, 64
          %s2683 = scalar_lea.hbm %s14, %s2682
          %s2684 = sshll.u32 %s2659, 4
          %s2685 = int_to_ptr.vmem [resolvable:$true] %s2684
          %2690 = dma.vmem_to_hbm [thread:$0]  %s2685, 2048, %s2683, %s2656, 128, 128, 8
        $region80: #{tpu_custom_call.1} parent=71 // pred_fallthru
          _
        // Predicated region
        $region81: #{tpu_custom_call.1} parent=71 // pred_check
          %p2691 = pneg %p387
        $region82: #{tpu_custom_call.1} parent=71 // pred_check_branch
          %2693 = sbr.rel (%p2691) target = $region84
        $region83: #{tpu_custom_call.1} parent=71 // pred_region
          %s2694 = smul.u32 16, %s34
          %s2696 = ssub.s32 2048, 2048
          %2697 = vsyncadd %s2661, %s2696
          %s2698 = smul.addr %s2694, 2
          %s2699 = smul.addr %s2698, 64
          %s2700 = scalar_lea.hbm %s15, %s2699
          %s2701 = sshll.u32 %s2664, 4
          %s2702 = int_to_ptr.vmem [resolvable:$true] %s2701
          %2707 = dma.vmem_to_hbm [thread:$0]  %s2702, 2048, %s2700, %s2661, 128, 128, 8
        $region84: #{tpu_custom_call.1} parent=71 // pred_fallthru
          _
        // Predicated region
        $region85: #{tpu_custom_call.1} parent=71 // pred_check
          %p2708 = pneg %p413
        $region86: #{tpu_custom_call.1} parent=71 // pred_check_branch
          %2710 = sbr.rel (%p2708) target = $region88
        $region87: #{tpu_custom_call.1} parent=71 // pred_region
          %s2711 = smul.u32 16, %s34
        $region88: #{tpu_custom_call.1} parent=71 // pred_fallthru
          _
      $region72: #{tpu_custom_call.1} parent=5 // pred_fallthru
        _
      %p2712 = scmp.le.s32.totalorder 2, %s29
      // Predicated region
      $region89: #{tpu_custom_call.1} parent=5 // pred_check
        %p2713 = pneg %p2712
      $region90: #{tpu_custom_call.1} parent=5 // pred_check_branch
        %2715 = sbr.rel (%p2713) target = $region92
      $region91: #{tpu_custom_call.1} parent=5 // pred_region
        %s2716 = ssub.s32 %s29, 2
        // Predicated region
        $region93: #{tpu_custom_call.1} parent=91 // pred_check
          %p2717 = pneg %p341
        $region94: #{tpu_custom_call.1} parent=91 // pred_check_branch
          %2719 = sbr.rel (%p2717) target = $region96
        $region95: #{tpu_custom_call.1} parent=91 // pred_region
          %s2720 = smul.u32 16, %s35
          %p2721 = scmp.lt.s32.totalorder %s2720, 31
          %s2722 = scalar_select %p2721, %s2720, 31
          %s2723 = smul.addr %s2722, 8
          %s2724 = scalar_lea.vmem %s13, %s2723
        $region96: #{tpu_custom_call.1} parent=91 // pred_fallthru
          _
        // Predicated region
        $region97: #{tpu_custom_call.1} parent=91 // pred_check
          %p2725 = pneg %p367
        $region98: #{tpu_custom_call.1} parent=91 // pred_check_branch
          %2727 = sbr.rel (%p2725) target = $region100
        $region99: #{tpu_custom_call.1} parent=91 // pred_region
          %s2728 = sand.u32 %s352, 1
          %s2729 = scalar_lea.sflag [#allocation3], %s2728
          %s2730 = sand.u32 %s352, 1
          %s2731 = smul.addr %s2730, 128
          %s2732 = scalar_lea.vmem [#allocation2], %s2731
          %2733 = dma.done %s2729, 2048
        $region100: #{tpu_custom_call.1} parent=91 // pred_fallthru
          _
        // Predicated region
        $region101: #{tpu_custom_call.1} parent=91 // pred_check
          %p2734 = pneg %p393
        $region102: #{tpu_custom_call.1} parent=91 // pred_check_branch
          %2736 = sbr.rel (%p2734) target = $region104
        $region103: #{tpu_custom_call.1} parent=91 // pred_region
          %s2737 = sand.u32 %s378, 1
          %s2738 = scalar_lea.sflag [#allocation5], %s2737
          %s2739 = sand.u32 %s378, 1
          %s2740 = smul.addr %s2739, 128
          %s2741 = scalar_lea.vmem [#allocation4], %s2740
          %2742 = dma.done %s2738, 2048
        $region104: #{tpu_custom_call.1} parent=91 // pred_fallthru
          _
        // Predicated region
        $region105: #{tpu_custom_call.1} parent=91 // pred_check
          %p2743 = pneg %p419
        $region106: #{tpu_custom_call.1} parent=91 // pred_check_branch
          %2745 = sbr.rel (%p2743) target = $region108
        $region107: #{tpu_custom_call.1} parent=91 // pred_region
          %s2746 = smul.u32 16, %s35
          %p2747 = scmp.lt.s32.totalorder %s2746, 31
          %s2748 = scalar_select %p2747, %s2746, 31
          %s2749 = smul.addr %s2748, 8
          %s2750 = scalar_lea.vmem %s16, %s2749
        $region108: #{tpu_custom_call.1} parent=91 // pred_fallthru
          _
      $region92: #{tpu_custom_call.1} parent=5 // pred_fallthru
        _
    $region6: #{tpu_custom_call.1} parent=1 // loop_footer
      %s33 = sadd.s32 1, %s29
    $region7: #{tpu_custom_call.1} parent=1 // loop_footer_branch
      %28 = sbr.rel target = $region3
    $region8: #{tpu_custom_call.1} parent=1 // loop_exit
      _
    %2751 = vsyncpa [#allocation3], 1
    %s2752 = scalar_lea.sflag [#allocation3], 1
    %2753 = vsyncpa %s2752, 1
    %2754 = vsyncpa [#allocation5], 1
    %s2755 = scalar_lea.sflag [#allocation5], 1
    %2756 = vsyncpa %s2755, 1

</llo_original>
